<compile_context>
chip_gen: v7x
topology: tpu7x:2x2x1
jax: 0.10.0
libtpu: 0.0.40
codegen_flags: <defaults>
</compile_context>

<pallas_src>
import functools

import jax
import jax.numpy as jnp
from jax import lax
from jax.experimental import pallas as pl
from jax.experimental.pallas import tpu as pltpu

LANE = 128


def _round_up(v, m):
    return ((v + m - 1) // m) * m


def _pad2d(x, rows, cols):
    pr, pc = rows - x.shape[0], cols - x.shape[1]
    if pr == 0 and pc == 0:
        return x
    return jnp.pad(x, ((0, pr), (0, pc)))


# ---------------------------------------------------------------------------
# Kernels
# ---------------------------------------------------------------------------

def _encoder_stage1_kernel(a_ref, x_ref, w1_ref, b1_ref, h_ref):
    """h_block = relu(A_block @ (X @ W1) + b1)   -- GraphConv #0."""
    xw = jnp.dot(x_ref[...], w1_ref[...], preferred_element_type=jnp.float32)
    h = jnp.dot(a_ref[...], xw.astype(jnp.bfloat16),
                preferred_element_type=jnp.float32) + b1_ref[...]
    h_ref[...] = jnp.maximum(h, 0.0).astype(h_ref.dtype)


def _encoder_stage2_kernel(a_ref, h_ref, w23_ref, b23_ref, noise_ref, z_ref, *, h2p):
    """Fused GraphConv #1 + #2 ([mean|log_std]) + reparameterization sample."""
    hw = jnp.dot(h_ref[...], w23_ref[...], preferred_element_type=jnp.float32)
    m_ls = jnp.dot(a_ref[...], hw.astype(jnp.bfloat16),
                   preferred_element_type=jnp.float32) + b23_ref[...]
    mean = m_ls[:, :h2p]          # lane-aligned slice (h2p is a multiple of 128)
    log_std = m_ls[:, h2p:]
    z = mean + noise_ref[...] * jnp.exp(log_std)
    z_ref[...] = z.astype(z_ref.dtype)


def _decoder_kernel(zi_ref, zj_ref, out_ref):
    """out_block = sigmoid(z_i @ z_j^T); transpose folded into the contraction."""
    logits = lax.dot_general(zi_ref[...], zj_ref[...],
                             dimension_numbers=(((1,), (1,)), ((), ())),
                             preferred_element_type=jnp.float32)
    out_ref[...] = jax.nn.sigmoid(logits)


# ---------------------------------------------------------------------------
# Host wrapper
# ---------------------------------------------------------------------------

def vgae_forward(a_norm, x, w1, b1, w2, b2, w3, b3, noise,
                 *, tile_rows=128, tile_cols=128):
    n, in_dim = x.shape
    h1, h2 = w1.shape[1], w2.shape[1]
    tile_rows = min(tile_rows, n)
    tile_cols = min(tile_cols, n)
    assert n % tile_rows == 0 and n % tile_cols == 0, "N must divide the tile sizes"

    h1p = _round_up(h1, LANE)          # lane-dense hidden widths
    h2p = _round_up(h2, LANE)

    bf = jnp.bfloat16
    a_bf = a_norm.astype(bf)           # dominant HBM operand -> bf16
    x_bf = x.astype(bf)

    w1p = _pad2d(w1, in_dim, h1p).astype(bf)
    b1p = _pad2d(b1, 1, h1p)
    w23 = jnp.concatenate([_pad2d(w2, h1p, h2p), _pad2d(w3, h1p, h2p)],
                          axis=1).astype(bf)                 # (h1p, 2*h2p) mean|log_std
    b23 = jnp.concatenate([_pad2d(b2, 1, h2p), _pad2d(b3, 1, h2p)], axis=1)
    noise_p = _pad2d(noise, n, h2p)    # padded noise cols are 0 -> padded z cols are 0

    grid_rows = n // tile_rows

    # --- Encoder stage 1: h = relu(A_hat @ X @ W1 + b1), row-tiled over A ---
    h = pl.pallas_call(
        _encoder_stage1_kernel,
        out_shape=jax.ShapeDtypeStruct((n, h1p), bf),
        grid=(grid_rows,),
        in_specs=[
            pl.BlockSpec((tile_rows, n), lambda i: (i, 0)),   # A row block
            pl.BlockSpec((n, in_dim), lambda i: (0, 0)),      # X resident (bf16)
            pl.BlockSpec((in_dim, h1p), lambda i: (0, 0)),    # W1 resident (bf16)
            pl.BlockSpec((1, h1p), lambda i: (0, 0)),         # b1 resident
        ],
        out_specs=pl.BlockSpec((tile_rows, h1p), lambda i: (i, 0)),
        compiler_params=pltpu.CompilerParams(dimension_semantics=("parallel",)),
        cost_estimate=pl.CostEstimate(
            flops=2 * n * n * h1p + grid_rows * 2 * n * in_dim * h1p,
            transcendentals=0,
            bytes_accessed=2 * n * n + 2 * n * in_dim + 2 * in_dim * h1p + 2 * n * h1p),
    )(a_bf, x_bf, w1p, b1p)

    # --- Encoder stage 2: [mean|log_std] = A_hat @ h @ W23 + b23 ; sample z ---
    z = pl.pallas_call(
        functools.partial(_encoder_stage2_kernel, h2p=h2p),
        out_shape=jax.ShapeDtypeStruct((n, h2p), bf),
        grid=(grid_rows,),
        in_specs=[
            pl.BlockSpec((tile_rows, n), lambda i: (i, 0)),    # A row block
            pl.BlockSpec((n, h1p), lambda i: (0, 0)),          # h resident (bf16)
            pl.BlockSpec((h1p, 2 * h2p), lambda i: (0, 0)),    # W23 resident (bf16)
            pl.BlockSpec((1, 2 * h2p), lambda i: (0, 0)),      # b23 resident
            pl.BlockSpec((tile_rows, h2p), lambda i: (i, 0)),  # noise row block
        ],
        out_specs=pl.BlockSpec((tile_rows, h2p), lambda i: (i, 0)),
        compiler_params=pltpu.CompilerParams(dimension_semantics=("parallel",)),
        cost_estimate=pl.CostEstimate(
            flops=2 * n * n * (2 * h2p) + grid_rows * 2 * n * h1p * (2 * h2p),
            transcendentals=n * h2p,
            bytes_accessed=2 * n * n + 2 * n * h1p + 2 * h1p * 2 * h2p
                           + 4 * n * h2p + 2 * n * h2p),
    )(a_bf, h, w23, b23, noise_p)

    # --- Decoder: adj_rec = sigmoid(z @ z.T), 2-D tiled over the output ---
    adj_rec = pl.pallas_call(
        _decoder_kernel,
        out_shape=jax.ShapeDtypeStruct((n, n), jnp.float32),
        grid=(n // tile_rows, n // tile_cols),
        in_specs=[
            pl.BlockSpec((tile_rows, h2p), lambda i, j: (i, 0)),
            pl.BlockSpec((tile_cols, h2p), lambda i, j: (j, 0)),
        ],
        out_specs=pl.BlockSpec((tile_rows, tile_cols), lambda i, j: (i, j)),
        compiler_params=pltpu.CompilerParams(
            dimension_semantics=("parallel", "parallel")),
        cost_estimate=pl.CostEstimate(
            flops=2 * n * n * h2p,
            transcendentals=n * n,
            bytes_accessed=4 * n * n + 4 * n * h2p),
    )(z, z)

    return adj_rec


def normalize_adjacency(adj):
    # DGL GraphConv norm='both': D_in^{-1/2} A D_out^{-1/2}, degrees clamped >= 1.
    deg_out = jnp.maximum(adj.sum(axis=0), 1.0)   # out-degree of source nodes (cols)
    deg_in = jnp.maximum(adj.sum(axis=1), 1.0)    # in-degree of destination nodes (rows)
    return adj * (deg_in[:, None] ** -0.5) * (deg_out[None, :] ** -0.5)


def vgae_reference(a_norm, x, w1, b1, w2, b2, w3, b3, noise):
    """Pure-JAX reference mirroring the kernel's bf16-MXU / f32-accumulate numerics."""
    bf = jnp.bfloat16
    a_bf = a_norm.astype(bf)
    xw = jnp.dot(x.astype(bf), w1.astype(bf), preferred_element_type=jnp.float32)
    h = jnp.dot(a_bf, xw.astype(bf), preferred_element_type=jnp.float32) + b1
    h = jnp.maximum(h, 0.0).astype(bf)
    w23 = jnp.concatenate([w2, w3], axis=1).astype(bf)
    b23 = jnp.concatenate([b2, b3], axis=1)
    hw = jnp.dot(h, w23, preferred_element_type=jnp.float32)
    m_ls = jnp.dot(a_bf, hw.astype(bf), preferred_element_type=jnp.float32) + b23
    h2 = w2.shape[1]
    mean, log_std = m_ls[:, :h2], m_ls[:, h2:]
    z = (mean + noise * jnp.exp(log_std)).astype(bf)
    logits = lax.dot_general(z, z, dimension_numbers=(((1,), (1,)), ((), ())),
                             preferred_element_type=jnp.float32)
    return jax.nn.sigmoid(logits)


if __name__ == "__main__":
    N, IN_DIM, H1, H2 = 256, 32, 32, 16

    key = jax.random.PRNGKey(0)
    k_adj, k_x, k_w1, k_w2, k_w3, k_noise = jax.random.split(key, 6)

    # Random directed graph as dense adjacency (A[dst, src]).
    adj = (jax.random.uniform(k_adj, (N, N)) < 0.1).astype(jnp.float32)
    a_norm = normalize_adjacency(adj)

    x = jax.random.normal(k_x, (N, IN_DIM), dtype=jnp.float32)

    # Deterministic parameter init (xavier-ish scale).
    w1 = jax.random.normal(k_w1, (IN_DIM, H1), dtype=jnp.float32) * (1.0 / IN_DIM) ** 0.5
    b1 = jnp.zeros((1, H1), dtype=jnp.float32)
    w2 = jax.random.normal(k_w2, (H1, H2), dtype=jnp.float32) * (1.0 / H1) ** 0.5
    b2 = jnp.zeros((1, H2), dtype=jnp.float32)
    w3 = jax.random.normal(k_w3, (H1, H2), dtype=jnp.float32) * (1.0 / H1) ** 0.5
    b3 = jnp.zeros((1, H2), dtype=jnp.float32)

    # Gaussian noise for the reparameterization trick (torch.randn equivalent).
    noise = jax.random.normal(k_noise, (N, H2), dtype=jnp.float32)

    fwd = jax.jit(functools.partial(vgae_forward, tile_rows=128, tile_cols=128))
    adj_rec = jax.block_until_ready(fwd(a_norm, x, w1, b1, w2, b2, w3, b3, noise))

    adj_ref = vgae_reference(a_norm, x, w1, b1, w2, b2, w3, b3, noise)

    assert adj_rec.shape == (N, N)
    assert bool(jnp.all(jnp.isfinite(adj_rec)))
    max_err = float(jnp.max(jnp.abs(adj_rec - adj_ref)))
    assert max_err < 2e-3, f"max abs error {max_err}"

    print("KERNEL_OK")
</pallas_src>

<mosaic_0001>
module attributes {stable_mosaic.version = 11 : i64} {
  func.func @_decoder_kernel(%arg0: i32, %arg1: i32, %arg2: memref<128x128xbf16, #tpu.memory_space<vmem>>, %arg3: memref<128x128xbf16, #tpu.memory_space<vmem>>, %arg4: memref<128x128xf32, #tpu.memory_space<vmem>>) attributes {dimension_semantics = [#tpu.dimension_semantics<parallel>, #tpu.dimension_semantics<parallel>], iteration_bounds = array<i64: 2, 2>, scalar_prefetch = 0 : i64, scratch_operands = 0 : i64, tpu.core_type = #tpu.core_type<tc>, window_params = [{transform_indices = @transform_0, window_bounds = array<i64: 128, 128>}, {transform_indices = @transform_1, window_bounds = array<i64: 128, 128>}, {transform_indices = @transform_2, window_bounds = array<i64: 128, 128>}]} {
    %c0 = arith.constant 0 : index
    %c0_0 = arith.constant 0 : index
    %0 = vector.load %arg2[%c0, %c0_0] : memref<128x128xbf16, #tpu.memory_space<vmem>>, vector<128x128xbf16>
    %c0_1 = arith.constant 0 : index
    %c0_2 = arith.constant 0 : index
    %1 = vector.load %arg3[%c0_1, %c0_2] : memref<128x128xbf16, #tpu.memory_space<vmem>>, vector<128x128xbf16>
    %cst = arith.constant dense<0.000000e+00> : vector<128x128xf32>
    %2 = tpu.matmul %0, %1, %cst {dimension_numbers = #tpu.dot_dimension_numbers<[1], [1], [0], [0], [0, 0, 1, 0], [], []>} : vector<128x128xbf16>, vector<128x128xbf16>, vector<128x128xf32> -> vector<128x128xf32>
    %3 = arith.negf %2 : vector<128x128xf32>
    %4 = math.exp %3 : vector<128x128xf32>
    %cst_3 = arith.constant 1.000000e+00 : f32
    %5 = vector.broadcast %cst_3 : f32 to vector<128x128xf32>
    %6 = arith.addf %5, %4 : vector<128x128xf32>
    %7 = arith.divf %5, %6 : vector<128x128xf32>
    %c0_4 = arith.constant 0 : index
    %c0_5 = arith.constant 0 : index
    %8 = vector.load %arg4[%c0_4, %c0_5] : memref<128x128xf32, #tpu.memory_space<vmem>>, vector<128x128xf32>
    tpu.vector_store %arg4[%c0_4, %c0_5], %7 {strides = array<i32>} : memref<128x128xf32, #tpu.memory_space<vmem>>, vector<128x128xf32>,
    return
  }
  func.func @transform_0(%arg0: i32, %arg1: i32) -> (i32, i32) {
    %c0_i32 = arith.constant 0 : i32
    %c0_i32_0 = arith.constant 0 : i32
    return %arg0, %c0_i32 : i32, i32
  }
  func.func @transform_1(%arg0: i32, %arg1: i32) -> (i32, i32) {
    %c0_i32 = arith.constant 0 : i32
    %c0_i32_0 = arith.constant 0 : i32
    return %arg1, %c0_i32 : i32, i32
  }
  func.func @transform_2(%arg0: i32, %arg1: i32) -> (i32, i32) {
    %c0_i32 = arith.constant 0 : i32
    return %arg0, %arg1 : i32, i32
  }
}

module attributes {stable_mosaic.version = 11 : i64} {
  func.func @_encoder_stage2_kernel(%arg0: i32, %arg1: memref<128x256xbf16, #tpu.memory_space<vmem>>, %arg2: memref<256x128xbf16, #tpu.memory_space<vmem>>, %arg3: memref<128x256xbf16, #tpu.memory_space<vmem>>, %arg4: memref<1x256xf32, #tpu.memory_space<vmem>>, %arg5: memref<128x128xf32, #tpu.memory_space<vmem>>, %arg6: memref<128x128xbf16, #tpu.memory_space<vmem>>) attributes {dimension_semantics = [#tpu.dimension_semantics<parallel>], iteration_bounds = array<i64: 2>, scalar_prefetch = 0 : i64, scratch_operands = 0 : i64, tpu.core_type = #tpu.core_type<tc>, window_params = [{transform_indices = @transform_0, window_bounds = array<i64: 128, 256>}, {pipeline_mode = #tpu.pipeline_mode<synchronous>, transform_indices = @transform_1, window_bounds = array<i64: 256, 128>}, {pipeline_mode = #tpu.pipeline_mode<synchronous>, transform_indices = @transform_2, window_bounds = array<i64: 128, 256>}, {pipeline_mode = #tpu.pipeline_mode<synchronous>, transform_indices = @transform_3, window_bounds = array<i64: 1, 256>}, {transform_indices = @transform_4, window_bounds = array<i64: 128, 128>}, {transform_indices = @transform_5, window_bounds = array<i64: 128, 128>}]} {
    %c0 = arith.constant 0 : index
    %c0_0 = arith.constant 0 : index
    %0 = vector.load %arg2[%c0, %c0_0] : memref<256x128xbf16, #tpu.memory_space<vmem>>, vector<256x128xbf16>
    %c0_1 = arith.constant 0 : index
    %c0_2 = arith.constant 0 : index
    %1 = vector.load %arg3[%c0_1, %c0_2] : memref<128x256xbf16, #tpu.memory_space<vmem>>, vector<128x256xbf16>
    %cst = arith.constant dense<0.000000e+00> : vector<256x256xf32>
    %2 = tpu.matmul %0, %1, %cst {dimension_numbers = #tpu.dot_dimension_numbers<[1], [0], [0], [1], [0, 0, 1, 1], [], []>} : vector<256x128xbf16>, vector<128x256xbf16>, vector<256x256xf32> -> vector<256x256xf32>
    %c0_3 = arith.constant 0 : index
    %c0_4 = arith.constant 0 : index
    %3 = vector.load %arg1[%c0_3, %c0_4] : memref<128x256xbf16, #tpu.memory_space<vmem>>, vector<128x256xbf16>
    %4 = arith.truncf %2 : vector<256x256xf32> to vector<256x256xbf16>
    %cst_5 = arith.constant dense<0.000000e+00> : vector<128x256xf32>
    %5 = tpu.matmul %3, %4, %cst_5 {dimension_numbers = #tpu.dot_dimension_numbers<[1], [0], [0], [1], [0, 0, 1, 1], [], []>} : vector<128x256xbf16>, vector<256x256xbf16>, vector<128x256xf32> -> vector<128x256xf32>
    %c0_6 = arith.constant 0 : index
    %c0_7 = arith.constant 0 : index
    %6 = vector.load %arg4[%c0_6, %c0_7] : memref<1x256xf32, #tpu.memory_space<vmem>>, vector<1x256xf32>
    %7 = vector.broadcast %6 : vector<1x256xf32> to vector<128x256xf32>
    %8 = arith.addf %5, %7 : vector<128x256xf32>
    %9 = vector.extract_strided_slice %8 {offsets = [0, 0], sizes = [128, 128], strides = [1, 1]} : vector<128x256xf32> to vector<128x128xf32>
    %10 = vector.extract_strided_slice %8 {offsets = [0, 128], sizes = [128, 128], strides = [1, 1]} : vector<128x256xf32> to vector<128x128xf32>
    %c0_8 = arith.constant 0 : index
    %c0_9 = arith.constant 0 : index
    %11 = vector.load %arg5[%c0_8, %c0_9] : memref<128x128xf32, #tpu.memory_space<vmem>>, vector<128x128xf32>
    %12 = math.exp %10 : vector<128x128xf32>
    %13 = arith.mulf %11, %12 : vector<128x128xf32>
    %14 = arith.addf %9, %13 : vector<128x128xf32>
    %15 = arith.truncf %14 : vector<128x128xf32> to vector<128x128xbf16>
    %c0_10 = arith.constant 0 : index
    %c0_11 = arith.constant 0 : index
    %16 = vector.load %arg6[%c0_10, %c0_11] : memref<128x128xbf16, #tpu.memory_space<vmem>>, vector<128x128xbf16>
    tpu.vector_store %arg6[%c0_10, %c0_11], %15 {strides = array<i32>} : memref<128x128xbf16, #tpu.memory_space<vmem>>, vector<128x128xbf16>,
    return
  }
  func.func @transform_0(%arg0: i32) -> (i32, i32) {
    %c0_i32 = arith.constant 0 : i32
    %c0_i32_0 = arith.constant 0 : i32
    return %arg0, %c0_i32 : i32, i32
  }
  func.func @transform_1(%arg0: i32) -> (i32, i32) {
    %c0_i32 = arith.constant 0 : i32
    %c0_i32_0 = arith.constant 0 : i32
    %c0_i32_1 = arith.constant 0 : i32
    return %c0_i32, %c0_i32_0 : i32, i32
  }
  func.func @transform_2(%arg0: i32) -> (i32, i32) {
    %c0_i32 = arith.constant 0 : i32
    %c0_i32_0 = arith.constant 0 : i32
    %c0_i32_1 = arith.constant 0 : i32
    return %c0_i32, %c0_i32_0 : i32, i32
  }
  func.func @transform_3(%arg0: i32) -> (i32, i32) {
    %c0_i32 = arith.constant 0 : i32
    %c0_i32_0 = arith.constant 0 : i32
    %c0_i32_1 = arith.constant 0 : i32
    return %c0_i32, %c0_i32_0 : i32, i32
  }
  func.func @transform_4(%arg0: i32) -> (i32, i32) {
    %c0_i32 = arith.constant 0 : i32
    %c0_i32_0 = arith.constant 0 : i32
    return %arg0, %c0_i32 : i32, i32
  }
  func.func @transform_5(%arg0: i32) -> (i32, i32) {
    %c0_i32 = arith.constant 0 : i32
    %c0_i32_0 = arith.constant 0 : i32
    return %arg0, %c0_i32 : i32, i32
  }
}

module attributes {stable_mosaic.version = 11 : i64} {
  func.func @_encoder_stage1_kernel(%arg0: i32, %arg1: memref<128x256xbf16, #tpu.memory_space<vmem>>, %arg2: memref<256x32xbf16, #tpu.memory_space<vmem>>, %arg3: memref<32x128xbf16, #tpu.memory_space<vmem>>, %arg4: memref<1x128xf32, #tpu.memory_space<vmem>>, %arg5: memref<128x128xbf16, #tpu.memory_space<vmem>>) attributes {dimension_semantics = [#tpu.dimension_semantics<parallel>], iteration_bounds = array<i64: 2>, scalar_prefetch = 0 : i64, scratch_operands = 0 : i64, tpu.core_type = #tpu.core_type<tc>, window_params = [{transform_indices = @transform_0, window_bounds = array<i64: 128, 256>}, {pipeline_mode = #tpu.pipeline_mode<synchronous>, transform_indices = @transform_1, window_bounds = array<i64: 256, 32>}, {pipeline_mode = #tpu.pipeline_mode<synchronous>, transform_indices = @transform_2, window_bounds = array<i64: 32, 128>}, {pipeline_mode = #tpu.pipeline_mode<synchronous>, transform_indices = @transform_3, window_bounds = array<i64: 1, 128>}, {transform_indices = @transform_4, window_bounds = array<i64: 128, 128>}]} {
    %c0 = arith.constant 0 : index
    %c0_0 = arith.constant 0 : index
    %0 = vector.load %arg2[%c0, %c0_0] : memref<256x32xbf16, #tpu.memory_space<vmem>>, vector<256x32xbf16>
    %c0_1 = arith.constant 0 : index
    %c0_2 = arith.constant 0 : index
    %1 = vector.load %arg3[%c0_1, %c0_2] : memref<32x128xbf16, #tpu.memory_space<vmem>>, vector<32x128xbf16>
    %cst = arith.constant dense<0.000000e+00> : vector<256x128xf32>
    %2 = tpu.matmul %0, %1, %cst {dimension_numbers = #tpu.dot_dimension_numbers<[1], [0], [0], [1], [0, 0, 1, 1], [], []>} : vector<256x32xbf16>, vector<32x128xbf16>, vector<256x128xf32> -> vector<256x128xf32>
    %c0_3 = arith.constant 0 : index
    %c0_4 = arith.constant 0 : index
    %3 = vector.load %arg1[%c0_3, %c0_4] : memref<128x256xbf16, #tpu.memory_space<vmem>>, vector<128x256xbf16>
    %4 = arith.truncf %2 : vector<256x128xf32> to vector<256x128xbf16>
    %cst_5 = arith.constant dense<0.000000e+00> : vector<128x128xf32>
    %5 = tpu.matmul %3, %4, %cst_5 {dimension_numbers = #tpu.dot_dimension_numbers<[1], [0], [0], [1], [0, 0, 1, 1], [], []>} : vector<128x256xbf16>, vector<256x128xbf16>, vector<128x128xf32> -> vector<128x128xf32>
    %c0_6 = arith.constant 0 : index
    %c0_7 = arith.constant 0 : index
    %6 = vector.load %arg4[%c0_6, %c0_7] : memref<1x128xf32, #tpu.memory_space<vmem>>, vector<1x128xf32>
    %7 = vector.broadcast %6 : vector<1x128xf32> to vector<128x128xf32>
    %8 = arith.addf %5, %7 : vector<128x128xf32>
    %cst_8 = arith.constant 0.000000e+00 : f32
    %9 = vector.broadcast %cst_8 : f32 to vector<128x128xf32>
    %10 = arith.maximumf %8, %9 : vector<128x128xf32>
    %11 = arith.truncf %10 : vector<128x128xf32> to vector<128x128xbf16>
    %c0_9 = arith.constant 0 : index
    %c0_10 = arith.constant 0 : index
    %12 = vector.load %arg5[%c0_9, %c0_10] : memref<128x128xbf16, #tpu.memory_space<vmem>>, vector<128x128xbf16>
    tpu.vector_store %arg5[%c0_9, %c0_10], %11 {strides = array<i32>} : memref<128x128xbf16, #tpu.memory_space<vmem>>, vector<128x128xbf16>,
    return
  }
  func.func @transform_0(%arg0: i32) -> (i32, i32) {
    %c0_i32 = arith.constant 0 : i32
    %c0_i32_0 = arith.constant 0 : i32
    return %arg0, %c0_i32 : i32, i32
  }
  func.func @transform_1(%arg0: i32) -> (i32, i32) {
    %c0_i32 = arith.constant 0 : i32
    %c0_i32_0 = arith.constant 0 : i32
    %c0_i32_1 = arith.constant 0 : i32
    return %c0_i32, %c0_i32_0 : i32, i32
  }
  func.func @transform_2(%arg0: i32) -> (i32, i32) {
    %c0_i32 = arith.constant 0 : i32
    %c0_i32_0 = arith.constant 0 : i32
    %c0_i32_1 = arith.constant 0 : i32
    return %c0_i32, %c0_i32_0 : i32, i32
  }
  func.func @transform_3(%arg0: i32) -> (i32, i32) {
    %c0_i32 = arith.constant 0 : i32
    %c0_i32_0 = arith.constant 0 : i32
    %c0_i32_1 = arith.constant 0 : i32
    return %c0_i32, %c0_i32_0 : i32, i32
  }
  func.func @transform_4(%arg0: i32) -> (i32, i32) {
    %c0_i32 = arith.constant 0 : i32
    %c0_i32_0 = arith.constant 0 : i32
    return %arg0, %c0_i32 : i32, i32
  }
}

</mosaic_0001>

<llo_original>
// kernel: vgae_forward.5
$region0: #{vgae_forward.5}
  #allocation0 [shape = 'u32[]', space=smem, size = 0x4, offset = 0x4, fixed_abs, tag = 'smem constant byte address 0x4 - core index']
  #allocation1 [shape = 'u32[144,128]{1,0:T(1,128)}', space=vmem, size = 0x12000, scoped, tag = 'internal scratch']
  %s0 = inlined_call_operand.vmem [shape: bf16[256,128], index: 0, kind: input, shape index: {}, may-alias: {0,1}]
  %s1 = inlined_call_operand.vmem [shape: bf16[256,128], index: 1, kind: input, shape index: {}, may-alias: {0,1}]
  %s2 = inlined_call_operand.hbm [shape: f32[256,256], index: 2, kind: output, shape index: {}]
  %s3 = sld [smem:[#allocation0]]
  $region41: #{vgae_forward.5} parent=0
    _
  %s5 = ssub.s32 1, %s3
  %s6 = scalar_select 0, %s5, %s3
  $region1: #{vgae_forward.5} parent=0
    #allocation2 [shape = 'u8[131072]{0}', space=vmem, size = 0x20000, scoped, tag = 'output window, operand 0']
    #allocation3 [shape = 's32[2]{0}', space=sflag, size = 0x8, scoped, tag = 'scoped memory for vgae_forward.5']
    %7 = vsyncpa [#allocation3], 0
    %s8 = scalar_lea.sflag [#allocation3], 1
    %9 = vsyncpa %s8, 0
    loop: start=0, step=1, limit=6
    $region2: #{vgae_forward.5} parent=1 // loop_pre_header
      _
    $region3: #{vgae_forward.5} parent=1 // loop_header
      %s11 = sphi 0, %s15
      %p12 = scmp.ge.s32.totalorder %s11, 6
      %s18 = sphi 0, %s30
      %s19 = sphi 0, %s26
      %s20 = sphi 0, %s18
      %s21 = sphi 0, %s19
      %s22 = sphi 0, %s20
      %s23 = sphi 0, %s21
      %s33 = sphi 0, %s35
      %s36 = sphi 0, %s33
      %s37 = sphi 0, %s36
      %s53 = sphi 0, %s37
      %s59 = sphi 0, %s61
      %s62 = sphi 0, %s59
      %s63 = sphi 0, %s62
      %s79 = sphi 0, %s63
      %s87 = sphi 0, %s89
      %s90 = sphi 0, %s87
      %s91 = sphi 0, %s90
      %s107 = sphi 0, %s91
    $region4: #{vgae_forward.5} parent=1 // loop_header_branch
      %14 = sbr.rel (%p12) target = $region8
    $region5: #{vgae_forward.5} parent=1 // loop_body
      %s16 = ssub.s32 %s11, 1
      %s17 = ssub.s32 %s11, 2
      %s24 = sadd.s32 1, %s19
      %p25 = scmp.ge.s32.totalorder %s24, 2
      %s26 = scalar_select %p25, 0, %s24
      %s27 = sadd.s32 1, %s18
      %s28 = scalar_select %p25, %s27, %s18
      %p29 = scmp.ge.s32.totalorder %s28, 2
      %s30 = scalar_select %p29, 0, %s28
      %s31 = ssub.s32 %s18, %s30
      %p32 = scmp.eq.s32.totalorder %s31, 0
      %s34 = sadd.s32 %s33, 1
      %s35 = scalar_select %p32, %s33, %s34
      %p38 = pneg %p32
      %p39 = scmp.eq.s32.totalorder %s11, 3
      %p40 = por %p38, %p39
      %p41 = scmp.ne.s32.totalorder %s33, %s36
      %p42 = scmp.eq.s32.totalorder %s11, 0
      %p43 = por %p41, %p42
      %p44 = scmp.ne.s32.totalorder %s33, %s36
      %p45 = scmp.eq.s32.totalorder %s16, 3
      %p46 = por %p44, %p45
      %p47 = scmp.ne.s32.totalorder %s36, %s37
      %p48 = scmp.eq.s32.totalorder %s16, 0
      %p49 = por %p47, %p48
      %p50 = scmp.ne.s32.totalorder %s36, %s37
      %p51 = scmp.eq.s32.totalorder %s17, 3
      %p52 = por %p50, %p51
      %p54 = scmp.ne.s32.totalorder %s37, %s53
      %p55 = scmp.eq.s32.totalorder %s17, 0
      %p56 = por %p54, %p55
      %s57 = ssub.s32 %s19, %s26
      %p58 = scmp.eq.s32.totalorder %s57, 0
      %s60 = sadd.s32 %s59, 1
      %s61 = scalar_select %p58, %s59, %s60
      %p64 = pneg %p58
      %p65 = scmp.eq.s32.totalorder %s11, 3
      %p66 = por %p64, %p65
      %p67 = scmp.ne.s32.totalorder %s59, %s62
      %p68 = scmp.eq.s32.totalorder %s11, 0
      %p69 = por %p67, %p68
      %p70 = scmp.ne.s32.totalorder %s59, %s62
      %p71 = scmp.eq.s32.totalorder %s16, 3
      %p72 = por %p70, %p71
      %p73 = scmp.ne.s32.totalorder %s62, %s63
      %p74 = scmp.eq.s32.totalorder %s16, 0
      %p75 = por %p73, %p74
      %p76 = scmp.ne.s32.totalorder %s62, %s63
      %p77 = scmp.eq.s32.totalorder %s17, 3
      %p78 = por %p76, %p77
      %p80 = scmp.ne.s32.totalorder %s63, %s79
      %p81 = scmp.eq.s32.totalorder %s17, 0
      %p82 = por %p80, %p81
      %s83 = ssub.s32 %s18, %s30
      %s84 = ssub.s32 %s19, %s26
      %s85 = sor.u32 %s83, %s84
      %p86 = scmp.eq.s32.totalorder %s85, 0
      %s88 = sadd.s32 %s87, 1
      %s89 = scalar_select %p86, %s87, %s88
      %p92 = pneg %p86
      %p93 = scmp.eq.s32.totalorder %s11, 3
      %p94 = por %p92, %p93
      %p95 = scmp.ne.s32.totalorder %s87, %s90
      %p96 = scmp.eq.s32.totalorder %s11, 0
      %p97 = por %p95, %p96
      %p98 = scmp.ne.s32.totalorder %s87, %s90
      %p99 = scmp.eq.s32.totalorder %s16, 3
      %p100 = por %p98, %p99
      %p101 = scmp.ne.s32.totalorder %s90, %s91
      %p102 = scmp.eq.s32.totalorder %s16, 0
      %p103 = por %p101, %p102
      %p104 = scmp.ne.s32.totalorder %s90, %s91
      %p105 = scmp.eq.s32.totalorder %s17, 3
      %p106 = por %p104, %p105
      %p108 = scmp.ne.s32.totalorder %s91, %s107
      %p109 = scmp.eq.s32.totalorder %s17, 0
      %p110 = por %p108, %p109
      %p111 = scmp.le.s32.totalorder 1, %s11
      %p112 = scmp.lt.s32.totalorder %s11, 5
      %p113 = pnand %p111, %p112
      %p114 = pneg %p113
      // Predicated region
      $region9: #{vgae_forward.5} parent=5 // pred_check
        _
      $region10: #{vgae_forward.5} parent=5 // pred_check_branch
        %116 = sbr.rel (%p113) target = $region12
      $region11: #{vgae_forward.5} parent=5 // pred_region
        %s117 = ssub.s32 %s11, 1
      $region12: #{vgae_forward.5} parent=5 // pred_fallthru
        _
      %p118 = scmp.lt.s32.totalorder %s11, 4
      // Predicated region
      $region13: #{vgae_forward.5} parent=5 // pred_check
        %p119 = pneg %p118
      $region14: #{vgae_forward.5} parent=5 // pred_check_branch
        %121 = sbr.rel (%p119) target = $region16
      $region15: #{vgae_forward.5} parent=5 // pred_region
        // Predicated region
        $region17: #{vgae_forward.5} parent=15 // pred_check
          %p122 = pneg %p43
        $region18: #{vgae_forward.5} parent=15 // pred_check_branch
          %124 = sbr.rel (%p122) target = $region20
        $region19: #{vgae_forward.5} parent=15 // pred_region
          %s125 = smul.u32 16, %s18
          %p126 = scmp.lt.s32.totalorder %s125, 31
          %s127 = scalar_select %p126, %s125, 31
          %s128 = smul.addr %s127, 4
          %s129 = scalar_lea.vmem %s0, %s128
          %s130 = smul.u32 16, %s18
        $region20: #{vgae_forward.5} parent=15 // pred_fallthru
          _
        // Predicated region
        $region21: #{vgae_forward.5} parent=15 // pred_check
          %p131 = pneg %p69
        $region22: #{vgae_forward.5} parent=15 // pred_check_branch
          %133 = sbr.rel (%p131) target = $region24
        $region23: #{vgae_forward.5} parent=15 // pred_region
          %s134 = smul.u32 16, %s19
          %p135 = scmp.lt.s32.totalorder %s134, 31
          %s136 = scalar_select %p135, %s134, 31
          %s137 = smul.addr %s136, 4
          %s138 = scalar_lea.vmem %s1, %s137
          %s139 = smul.u32 16, %s19
        $region24: #{vgae_forward.5} parent=15 // pred_fallthru
          _
      $region16: #{vgae_forward.5} parent=5 // pred_fallthru
        _
      %p140 = scmp.le.s32.totalorder 1, %s11
      %p141 = scmp.lt.s32.totalorder %s11, 5
      %p142 = pnand %p140, %p141
      %p143 = pneg %p142
      // Predicated region
      $region25: #{vgae_forward.5} parent=5 // pred_check
        _
      $region26: #{vgae_forward.5} parent=5 // pred_check_branch
        %145 = sbr.rel (%p142) target = $region28
      $region27: #{vgae_forward.5} parent=5 // pred_region
        %s146 = ssub.s32 %s11, 1
        %s147 = smul.u32 16, %s20
        %p148 = scmp.lt.s32.totalorder %s147, 31
        %s149 = scalar_select %p148, %s147, 31
        %s150 = smul.addr %s149, 4
        %s151 = scalar_lea.vmem %s0, %s150
        %p152 = pneg %p49
        %p153 = pneg %p46
        %s154 = smul.u32 16, %s21
        %p155 = scmp.lt.s32.totalorder %s154, 31
        %s156 = scalar_select %p155, %s154, 31
        %s157 = smul.addr %s156, 4
        %s158 = scalar_lea.vmem %s1, %s157
        %p159 = pneg %p75
        %p160 = pneg %p72
        %p161 = pneg %p103
        %p162 = pneg %p100
        %s163 = sand.u32 %s90, 1
        %s164 = scalar_lea.sflag [#allocation3], %s163
        %s165 = sand.u32 %s90, 1
        %s166 = smul.addr %s165, 128
        %s167 = scalar_lea.vmem [#allocation2], %s166
        %s168 = smul.u32 16, %s20
        %p169 = scmp.lt.s32.totalorder %s168, 31
        %s170 = scalar_select %p169, %s168, 31
        %s171 = smul.addr %s170, 4
        %s172 = scalar_lea.vmem %s0, %s171
        %s173 = smul.u32 16, %s20
        %s174 = smul.u32 16, %s21
        %p175 = scmp.lt.s32.totalorder %s174, 31
        %s176 = scalar_select %p175, %s174, 31
        %s177 = smul.addr %s176, 4
        %s178 = scalar_lea.vmem %s1, %s177
        %s179 = smul.u32 16, %s21
        %s180 = smul.u32 16, %s20
        %v182 = vld [vmem:[%s172] sm:$0xf]
        %v183 = vld [vmem:[%s172 + $0x4] sm:$0xf]
        %v184 = vld [vmem:[%s172 + $0x8] sm:$0xf]
        %v185 = vld [vmem:[%s172 + $0xc] sm:$0xf]
        %v186 = vld [vmem:[%s172 + $0x10] sm:$0xf]
        %v187 = vld [vmem:[%s172 + $0x14] sm:$0xf]
        %v188 = vld [vmem:[%s172 + $0x18] sm:$0xf]
        %v189 = vld [vmem:[%s172 + $0x1c] sm:$0xf]
        %v190 = vld [vmem:[%s172 + $0x20] sm:$0xf]
        %v191 = vld [vmem:[%s172 + $0x24] sm:$0xf]
        %v192 = vld [vmem:[%s172 + $0x28] sm:$0xf]
        %v193 = vld [vmem:[%s172 + $0x2c] sm:$0xf]
        %v194 = vld [vmem:[%s172 + $0x30] sm:$0xf]
        %v195 = vld [vmem:[%s172 + $0x34] sm:$0xf]
        %v196 = vld [vmem:[%s172 + $0x38] sm:$0xf]
        %v197 = vld [vmem:[%s172 + $0x3c] sm:$0xf]
        %v198 = vld [vmem:[%s178] sm:$0xf]
        %v199 = vld [vmem:[%s178 + $0x4] sm:$0xf]
        %v200 = vld [vmem:[%s178 + $0x8] sm:$0xf]
        %v201 = vld [vmem:[%s178 + $0xc] sm:$0xf]
        %v202 = vld [vmem:[%s178 + $0x10] sm:$0xf]
        %v203 = vld [vmem:[%s178 + $0x14] sm:$0xf]
        %v204 = vld [vmem:[%s178 + $0x18] sm:$0xf]
        %v205 = vld [vmem:[%s178 + $0x1c] sm:$0xf]
        %v206 = vld [vmem:[%s178 + $0x20] sm:$0xf]
        %v207 = vld [vmem:[%s178 + $0x24] sm:$0xf]
        %v208 = vld [vmem:[%s178 + $0x28] sm:$0xf]
        %v209 = vld [vmem:[%s178 + $0x2c] sm:$0xf]
        %v210 = vld [vmem:[%s178 + $0x30] sm:$0xf]
        %v211 = vld [vmem:[%s178 + $0x34] sm:$0xf]
        %v212 = vld [vmem:[%s178 + $0x38] sm:$0xf]
        %v213 = vld [vmem:[%s178 + $0x3c] sm:$0xf]
        %v230 = vunpack.c.l.b16 %v182
        %v231 = vunpack.c.l.b16 %v183
        %v232 = vunpack.c.l.b16 %v184
        %v233 = vunpack.c.l.b16 %v185
        %v234 = vunpack.c.l.b16 %v186
        %v235 = vunpack.c.l.b16 %v187
        %v236 = vunpack.c.l.b16 %v188
        %v237 = vunpack.c.l.b16 %v189
        %v238 = vunpack.c.l.b16 %v190
        %v239 = vunpack.c.l.b16 %v191
        %v240 = vunpack.c.l.b16 %v192
        %v241 = vunpack.c.l.b16 %v193
        %v242 = vunpack.c.l.b16 %v194
        %v243 = vunpack.c.l.b16 %v195
        %v244 = vunpack.c.l.b16 %v196
        %v245 = vunpack.c.l.b16 %v197
        %v246 = vpack.c.b16 %v231, %v230
        %v247 = vpack.c.b16 %v233, %v232
        %v248 = vpack.c.b16 %v235, %v234
        %v249 = vpack.c.b16 %v237, %v236
        %v250 = vpack.c.b16 %v239, %v238
        %v251 = vpack.c.b16 %v241, %v240
        %v252 = vpack.c.b16 %v243, %v242
        %v253 = vpack.c.b16 %v245, %v244
        %v278 = vunpack.c.l.b16 %v198
        %v279 = vunpack.c.l.b16 %v199
        %v280 = vunpack.c.l.b16 %v200
        %v281 = vunpack.c.l.b16 %v201
        %v282 = vunpack.c.l.b16 %v202
        %v283 = vunpack.c.l.b16 %v203
        %v284 = vunpack.c.l.b16 %v204
        %v285 = vunpack.c.l.b16 %v205
        %v286 = vunpack.c.l.b16 %v206
        %v287 = vunpack.c.l.b16 %v207
        %v288 = vunpack.c.l.b16 %v208
        %v289 = vunpack.c.l.b16 %v209
        %v290 = vunpack.c.l.b16 %v210
        %v291 = vunpack.c.l.b16 %v211
        %v292 = vunpack.c.l.b16 %v212
        %v293 = vunpack.c.l.b16 %v213
        %v294 = vpack.c.b16 %v279, %v278
        %v295 = vpack.c.b16 %v281, %v280
        %v296 = vpack.c.b16 %v283, %v282
        %v297 = vpack.c.b16 %v285, %v284
        %v298 = vpack.c.b16 %v287, %v286
        %v299 = vpack.c.b16 %v289, %v288
        %v300 = vpack.c.b16 %v291, %v290
        %v301 = vpack.c.b16 %v293, %v292
        %310 = vmatprep.subr.bf16.mxu0 0
        %311 = vmatpush1.bf16.xpose.msra.mxu0 %v294
        %312 = vmatprep.subr.bf16.mxu0 0
        %313 = vmatpush1.bf16.xpose.msra.mxu0 %v295
        %314 = vmatprep.subr.bf16.mxu0 0
        %315 = vmatpush1.bf16.xpose.msra.mxu0 %v296
        %316 = vmatprep.subr.bf16.mxu0 0
        %317 = vmatpush1.bf16.xpose.msra.mxu0 %v297
        %318 = vmatprep.subr.bf16.mxu0 0
        %319 = vmatpush1.bf16.xpose.msra.mxu0 %v298
        %320 = vmatprep.subr.bf16.mxu0 0
        %321 = vmatpush1.bf16.xpose.msra.mxu0 %v299
        %322 = vmatprep.subr.bf16.mxu0 0
        %323 = vmatpush1.bf16.xpose.msra.mxu0 %v300
        %324 = vmatprep.subr.bf16.mxu0 0
        %325 = vmatpush1.bf16.xpose.msra.mxu0 %v301
        %326 = vmatprep.subr.bf16.mxu0 0
        %327 = vmatpush1.bf16.xpose.msra.mxu0 0
        %328 = vmatprep.subr.bf16.mxu0 0
        %329 = vmatpush1.bf16.xpose.msra.mxu0 0
        %330 = vmatprep.subr.bf16.mxu0 0
        %331 = vmatpush1.bf16.xpose.msra.mxu0 0
        %332 = vmatprep.subr.bf16.mxu0 0
        %333 = vmatpush1.bf16.xpose.msra.mxu0 0
        %334 = vmatprep.subr.bf16.mxu0 0
        %335 = vmatpush1.bf16.xpose.msra.mxu0 0
        %336 = vmatprep.subr.bf16.mxu0 0
        %337 = vmatpush1.bf16.xpose.msra.mxu0 0
        %338 = vmatprep.subr.bf16.mxu0 0
        %339 = vmatpush1.bf16.xpose.msra.mxu0 0
        %340 = vmatprep.subr.bf16.mxu0 0
        %341 = vmatpush1.bf16.xpose.msra.mxu0 0
        %342 = vmatprep.mubr.bf16.mxu0 0
        %343 = vmatmul.mubr.bf16.gmra.mrb[0].mxu0 %v246
        %v344 = vpop.f32.mrb[0].mxu0
        %v345 = vadd.f32 0.0, %v344
        %v346 = vpop.f32.mrb[0].mxu0
        %v347 = vpop.f32.mrb[0].mxu0
        %v348 = vadd.f32 0.0, %v347
        %v349 = vpop.f32.mrb[0].mxu0
        %350 = vmatprep.mubr.bf16.mxu0 0
        %351 = vmatmul.mubr.bf16.gmra.mrb[0].mxu0 %v247
        %v352 = vpop.f32.mrb[0].mxu0
        %v353 = vadd.f32 0.0, %v352
        %v354 = vpop.f32.mrb[0].mxu0
        %v355 = vpop.f32.mrb[0].mxu0
        %v356 = vadd.f32 0.0, %v355
        %v357 = vpop.f32.mrb[0].mxu0
        %358 = vmatprep.mubr.bf16.mxu0 0
        %359 = vmatmul.mubr.bf16.gmra.mrb[0].mxu0 %v248
        %v360 = vpop.f32.mrb[0].mxu0
        %v361 = vadd.f32 0.0, %v360
        %v362 = vpop.f32.mrb[0].mxu0
        %v363 = vpop.f32.mrb[0].mxu0
        %v364 = vadd.f32 0.0, %v363
        %v365 = vpop.f32.mrb[0].mxu0
        %366 = vmatprep.mubr.bf16.mxu0 0
        %367 = vmatmul.mubr.bf16.gmra.mrb[0].mxu0 %v249
        %v368 = vpop.f32.mrb[0].mxu0
        %v369 = vadd.f32 0.0, %v368
        %v370 = vpop.f32.mrb[0].mxu0
        %v371 = vpop.f32.mrb[0].mxu0
        %v372 = vadd.f32 0.0, %v371
        %v373 = vpop.f32.mrb[0].mxu0
        %374 = vmatprep.mubr.bf16.mxu0 0
        %375 = vmatmul.mubr.bf16.gmra.mrb[0].mxu0 %v250
        %v376 = vpop.f32.mrb[0].mxu0
        %v377 = vadd.f32 0.0, %v376
        %v378 = vpop.f32.mrb[0].mxu0
        %v379 = vpop.f32.mrb[0].mxu0
        %v380 = vadd.f32 0.0, %v379
        %v381 = vpop.f32.mrb[0].mxu0
        %382 = vmatprep.mubr.bf16.mxu0 0
        %383 = vmatmul.mubr.bf16.gmra.mrb[0].mxu0 %v251
        %v384 = vpop.f32.mrb[0].mxu0
        %v385 = vadd.f32 0.0, %v384
        %v386 = vpop.f32.mrb[0].mxu0
        %v387 = vpop.f32.mrb[0].mxu0
        %v388 = vadd.f32 0.0, %v387
        %v389 = vpop.f32.mrb[0].mxu0
        %390 = vmatprep.mubr.bf16.mxu0 0
        %391 = vmatmul.mubr.bf16.gmra.mrb[0].mxu0 %v252
        %v392 = vpop.f32.mrb[0].mxu0
        %v393 = vadd.f32 0.0, %v392
        %v394 = vpop.f32.mrb[0].mxu0
        %v395 = vpop.f32.mrb[0].mxu0
        %v396 = vadd.f32 0.0, %v395
        %v397 = vpop.f32.mrb[0].mxu0
        %398 = vmatprep.mubr.bf16.mxu0 0
        %399 = vmatmul.mubr.bf16.gmra.mrb[0].mxu0 %v253
        %v400 = vpop.f32.mrb[0].mxu0
        %v401 = vadd.f32 0.0, %v400
        %v402 = vpop.f32.mrb[0].mxu0
        %v403 = vpop.f32.mrb[0].mxu0
        %v404 = vadd.f32 0.0, %v403
        %v405 = vpop.f32.mrb[0].mxu0
        %406 = vdwg.mxu0
        %v407 = vxor.u32 %v345, 2147483648
        %v408 = vxor.u32 %v348, 2147483648
        %v409 = vxor.u32 %v353, 2147483648
        %v410 = vxor.u32 %v356, 2147483648
        %v411 = vxor.u32 %v361, 2147483648
        %v412 = vxor.u32 %v364, 2147483648
        %v413 = vxor.u32 %v369, 2147483648
        %v414 = vxor.u32 %v372, 2147483648
        %v415 = vxor.u32 %v377, 2147483648
        %v416 = vxor.u32 %v380, 2147483648
        %v417 = vxor.u32 %v385, 2147483648
        %v418 = vxor.u32 %v388, 2147483648
        %v419 = vxor.u32 %v393, 2147483648
        %v420 = vxor.u32 %v396, 2147483648
        %v421 = vxor.u32 %v401, 2147483648
        %v422 = vxor.u32 %v404, 2147483648
        %v423 = vmul.f32 %v407, 1.442695
        %v424 = vpow.pop %v423
        %v425 = vmul.f32 %v408, 1.442695
        %v426 = vpow.pop %v425
        %v427 = vmul.f32 %v409, 1.442695
        %v428 = vpow.pop %v427
        %v429 = vmul.f32 %v410, 1.442695
        %v430 = vpow.pop %v429
        %v431 = vmul.f32 %v411, 1.442695
        %v432 = vpow.pop %v431
        %v433 = vmul.f32 %v412, 1.442695
        %v434 = vpow.pop %v433
        %v435 = vmul.f32 %v413, 1.442695
        %v436 = vpow.pop %v435
        %v437 = vmul.f32 %v414, 1.442695
        %v438 = vpow.pop %v437
        %v439 = vmul.f32 %v415, 1.442695
        %v440 = vpow.pop %v439
        %v441 = vmul.f32 %v416, 1.442695
        %v442 = vpow.pop %v441
        %v443 = vmul.f32 %v417, 1.442695
        %v444 = vpow.pop %v443
        %v445 = vmul.f32 %v418, 1.442695
        %v446 = vpow.pop %v445
        %v447 = vmul.f32 %v419, 1.442695
        %v448 = vpow.pop %v447
        %v449 = vmul.f32 %v420, 1.442695
        %v450 = vpow.pop %v449
        %v451 = vmul.f32 %v421, 1.442695
        %v452 = vpow.pop %v451
        %v453 = vmul.f32 %v422, 1.442695
        %v454 = vpow.pop %v453
        %v455 = vadd.f32 %v424, 1.0
        %v456 = vadd.f32 %v426, 1.0
        %v457 = vadd.f32 %v428, 1.0
        %v458 = vadd.f32 %v430, 1.0
        %v459 = vadd.f32 %v432, 1.0
        %v460 = vadd.f32 %v434, 1.0
        %v461 = vadd.f32 %v436, 1.0
        %v462 = vadd.f32 %v438, 1.0
        %v463 = vadd.f32 %v440, 1.0
        %v464 = vadd.f32 %v442, 1.0
        %v465 = vadd.f32 %v444, 1.0
        %v466 = vadd.f32 %v446, 1.0
        %v467 = vadd.f32 %v448, 1.0
        %v468 = vadd.f32 %v450, 1.0
        %v469 = vadd.f32 %v452, 1.0
        %v470 = vadd.f32 %v454, 1.0
        %v471 = vrcp.pop %v455
        %v472 = vmul.f32 1.0, %v471
        %v473 = vrcp.pop %v456
        %v474 = vmul.f32 1.0, %v473
        %v475 = vrcp.pop %v457
        %v476 = vmul.f32 1.0, %v475
        %v477 = vrcp.pop %v458
        %v478 = vmul.f32 1.0, %v477
        %v479 = vrcp.pop %v459
        %v480 = vmul.f32 1.0, %v479
        %v481 = vrcp.pop %v460
        %v482 = vmul.f32 1.0, %v481
        %v483 = vrcp.pop %v461
        %v484 = vmul.f32 1.0, %v483
        %v485 = vrcp.pop %v462
        %v486 = vmul.f32 1.0, %v485
        %v487 = vrcp.pop %v463
        %v488 = vmul.f32 1.0, %v487
        %v489 = vrcp.pop %v464
        %v490 = vmul.f32 1.0, %v489
        %v491 = vrcp.pop %v465
        %v492 = vmul.f32 1.0, %v491
        %v493 = vrcp.pop %v466
        %v494 = vmul.f32 1.0, %v493
        %v495 = vrcp.pop %v467
        %v496 = vmul.f32 1.0, %v495
        %v497 = vrcp.pop %v468
        %v498 = vmul.f32 1.0, %v497
        %v499 = vrcp.pop %v469
        %v500 = vmul.f32 1.0, %v499
        %v501 = vrcp.pop %v470
        %v502 = vmul.f32 1.0, %v501
        %503 = vst [vmem:[%s167] sm:$0xff] %v472
        %504 = vst [vmem:[%s167 + $0x8] sm:$0xff] %v474
        %505 = vst [vmem:[%s167 + $0x10] sm:$0xff] %v476
        %506 = vst [vmem:[%s167 + $0x18] sm:$0xff] %v478
        %507 = vst [vmem:[%s167 + $0x20] sm:$0xff] %v480
        %508 = vst [vmem:[%s167 + $0x28] sm:$0xff] %v482
        %509 = vst [vmem:[%s167 + $0x30] sm:$0xff] %v484
        %510 = vst [vmem:[%s167 + $0x38] sm:$0xff] %v486
        %511 = vst [vmem:[%s167 + $0x40] sm:$0xff] %v488
        %512 = vst [vmem:[%s167 + $0x48] sm:$0xff] %v490
        %513 = vst [vmem:[%s167 + $0x50] sm:$0xff] %v492
        %514 = vst [vmem:[%s167 + $0x58] sm:$0xff] %v494
        %515 = vst [vmem:[%s167 + $0x60] sm:$0xff] %v496
        %516 = vst [vmem:[%s167 + $0x68] sm:$0xff] %v498
        %517 = vst [vmem:[%s167 + $0x70] sm:$0xff] %v500
        %518 = vst [vmem:[%s167 + $0x78] sm:$0xff] %v502
        %s519 = sand.u32 %s90, 1
        %s520 = scalar_lea.sflag [#allocation3], %s519
        %s521 = sand.u32 %s90, 1
        %s522 = smul.addr %s521, 128
        %s523 = scalar_lea.vmem [#allocation2], %s522
        // Predicated region
        $region29: #{vgae_forward.5} parent=27 // pred_check
          %p524 = pneg %p100
        $region30: #{vgae_forward.5} parent=27 // pred_check_branch
          %526 = sbr.rel (%p524) target = $region32
        $region31: #{vgae_forward.5} parent=27 // pred_region
          %s527 = smul.u32 16, %s20
          %s529 = ssub.s32 2048, 2048
          %530 = vsyncadd %s520, %s529
          %s531 = smul.addr %s527, 2
          %s532 = sadd.s32 %s21, %s531
          %s533 = smul.addr %s532, 128
          %s534 = scalar_lea.hbm %s2, %s533
          %s535 = sshll.u32 %s523, 4
          %s536 = int_to_ptr.vmem [resolvable:$true] %s535
          %541 = dma.vmem_to_hbm [thread:$0]  %s536, 2048, %s534, %s520, 128, 256, 8
        $region32: #{vgae_forward.5} parent=27 // pred_fallthru
          _
      $region28: #{vgae_forward.5} parent=5 // pred_fallthru
        _
      %p542 = scmp.le.s32.totalorder 2, %s11
      // Predicated region
      $region33: #{vgae_forward.5} parent=5 // pred_check
        %p543 = pneg %p542
      $region34: #{vgae_forward.5} parent=5 // pred_check_branch
        %545 = sbr.rel (%p543) target = $region36
      $region35: #{vgae_forward.5} parent=5 // pred_region
        %s546 = ssub.s32 %s11, 2
        // Predicated region
        $region37: #{vgae_forward.5} parent=35 // pred_check
          %p547 = pneg %p106
        $region38: #{vgae_forward.5} parent=35 // pred_check_branch
          %549 = sbr.rel (%p547) target = $region40
        $region39: #{vgae_forward.5} parent=35 // pred_region
          %s550 = sand.u32 %s91, 1
          %s551 = scalar_lea.sflag [#allocation3], %s550
          %s552 = sand.u32 %s91, 1
          %s553 = smul.addr %s552, 128
          %s554 = scalar_lea.vmem [#allocation2], %s553
          %555 = dma.done %s551, 2048
        $region40: #{vgae_forward.5} parent=35 // pred_fallthru
          _
      $region36: #{vgae_forward.5} parent=5 // pred_fallthru
        _
    $region6: #{vgae_forward.5} parent=1 // loop_footer
      %s15 = sadd.s32 1, %s11
    $region7: #{vgae_forward.5} parent=1 // loop_footer_branch
      %10 = sbr.rel target = $region3
    $region8: #{vgae_forward.5} parent=1 // loop_exit
      _
    %556 = vsyncpa [#allocation3], 1
    %s557 = scalar_lea.sflag [#allocation3], 1
    %558 = vsyncpa %s557, 1

// kernel: vgae_forward.3
$region0: #{vgae_forward.3}
  #allocation0 [shape = 'u32[]', space=smem, size = 0x4, offset = 0x4, fixed_abs, tag = 'smem constant byte address 0x4 - core index']
  #allocation1 [shape = 'u32[144,128]{1,0:T(1,128)}', space=vmem, size = 0x12000, scoped, tag = 'internal scratch']
  %s0 = inlined_call_operand.vmem [shape: bf16[256,256], index: 0, kind: input, shape index: {}]
  %s1 = inlined_call_operand.vmem [shape: bf16[256,32], index: 1, kind: input, shape index: {}]
  %s2 = inlined_call_operand.vmem [shape: bf16[32,128], index: 2, kind: input, shape index: {}]
  %s3 = inlined_call_operand.vmem [shape: f32[1,128], index: 3, kind: input, shape index: {}]
  %s4 = inlined_call_operand.vmem [shape: bf16[256,128], index: 4, kind: output, shape index: {}]
  %s5 = sld [smem:[#allocation0]]
  $region49: #{vgae_forward.3} parent=0
    _
  %s7 = ssub.s32 1, %s5
  %s8 = scalar_select 0, %s7, %s5
  loop: start=0, step=1, limit=4
  $region2: #{vgae_forward.3} parent=0 // loop_pre_header
    _
  $region3: #{vgae_forward.3} parent=0 // loop_header
    %s10 = sphi 0, %s14
    %p11 = scmp.ge.s32.totalorder %s10, 4
    %s20 = sphi 0, %s22
    %s23 = sphi 0, %s20
    %s24 = sphi 0, %s23
    %s40 = sphi 0, %s24
    %s44 = sphi 0, %s44
    %s46 = sphi 0, %s44
    %s47 = sphi 0, %s46
    %s61 = sphi 0, %s47
    %s65 = sphi 0, %s65
    %s67 = sphi 0, %s65
    %s68 = sphi 0, %s67
    %s82 = sphi 0, %s68
    %s86 = sphi 0, %s86
    %s88 = sphi 0, %s86
    %s89 = sphi 0, %s88
    %s103 = sphi 0, %s89
    %s109 = sphi 0, %s111
    %s112 = sphi 0, %s109
    %s113 = sphi 0, %s112
    %s129 = sphi 0, %s113
  $region4: #{vgae_forward.3} parent=0 // loop_header_branch
    %13 = sbr.rel (%p11) target = $region8
  $region5: #{vgae_forward.3} parent=0 // loop_body
    %s15 = ssub.s32 %s10, 1
    %s16 = ssub.s32 %s10, 2
    %s17 = sadd.s32 %s10, 1
    %s18 = ssub.s32 %s10, %s17
    %p19 = scmp.eq.s32.totalorder %s18, 0
    %s21 = sadd.s32 %s20, 1
    %s22 = scalar_select %p19, %s20, %s21
    %p25 = pneg %p19
    %p26 = scmp.eq.s32.totalorder %s10, 1
    %p27 = por %p25, %p26
    %p28 = scmp.ne.s32.totalorder %s20, %s23
    %p29 = scmp.eq.s32.totalorder %s10, 0
    %p30 = por %p28, %p29
    %p31 = scmp.ne.s32.totalorder %s20, %s23
    %p32 = scmp.eq.s32.totalorder %s15, 1
    %p33 = por %p31, %p32
    %p34 = scmp.ne.s32.totalorder %s23, %s24
    %p35 = scmp.eq.s32.totalorder %s15, 0
    %p36 = por %p34, %p35
    %p37 = scmp.ne.s32.totalorder %s23, %s24
    %p38 = scmp.eq.s32.totalorder %s16, 1
    %p39 = por %p37, %p38
    %p41 = scmp.ne.s32.totalorder %s24, %s40
    %p42 = scmp.eq.s32.totalorder %s16, 0
    %p43 = por %p41, %p42
    %s45 = sadd.s32 %s44, 1
    %p48 = scmp.eq.s32.totalorder %s10, 1
    %p49 = scmp.ne.s32.totalorder %s44, %s46
    %p50 = scmp.eq.s32.totalorder %s10, 0
    %p51 = por %p49, %p50
    %p52 = scmp.ne.s32.totalorder %s44, %s46
    %p53 = scmp.eq.s32.totalorder %s15, 1
    %p54 = por %p52, %p53
    %p55 = scmp.ne.s32.totalorder %s46, %s47
    %p56 = scmp.eq.s32.totalorder %s15, 0
    %p57 = por %p55, %p56
    %p58 = scmp.ne.s32.totalorder %s46, %s47
    %p59 = scmp.eq.s32.totalorder %s16, 1
    %p60 = por %p58, %p59
    %p62 = scmp.ne.s32.totalorder %s47, %s61
    %p63 = scmp.eq.s32.totalorder %s16, 0
    %p64 = por %p62, %p63
    %s66 = sadd.s32 %s65, 1
    %p69 = scmp.eq.s32.totalorder %s10, 1
    %p70 = scmp.ne.s32.totalorder %s65, %s67
    %p71 = scmp.eq.s32.totalorder %s10, 0
    %p72 = por %p70, %p71
    %p73 = scmp.ne.s32.totalorder %s65, %s67
    %p74 = scmp.eq.s32.totalorder %s15, 1
    %p75 = por %p73, %p74
    %p76 = scmp.ne.s32.totalorder %s67, %s68
    %p77 = scmp.eq.s32.totalorder %s15, 0
    %p78 = por %p76, %p77
    %p79 = scmp.ne.s32.totalorder %s67, %s68
    %p80 = scmp.eq.s32.totalorder %s16, 1
    %p81 = por %p79, %p80
    %p83 = scmp.ne.s32.totalorder %s68, %s82
    %p84 = scmp.eq.s32.totalorder %s16, 0
    %p85 = por %p83, %p84
    %s87 = sadd.s32 %s86, 1
    %p90 = scmp.eq.s32.totalorder %s10, 1
    %p91 = scmp.ne.s32.totalorder %s86, %s88
    %p92 = scmp.eq.s32.totalorder %s10, 0
    %p93 = por %p91, %p92
    %p94 = scmp.ne.s32.totalorder %s86, %s88
    %p95 = scmp.eq.s32.totalorder %s15, 1
    %p96 = por %p94, %p95
    %p97 = scmp.ne.s32.totalorder %s88, %s89
    %p98 = scmp.eq.s32.totalorder %s15, 0
    %p99 = por %p97, %p98
    %p100 = scmp.ne.s32.totalorder %s88, %s89
    %p101 = scmp.eq.s32.totalorder %s16, 1
    %p102 = por %p100, %p101
    %p104 = scmp.ne.s32.totalorder %s89, %s103
    %p105 = scmp.eq.s32.totalorder %s16, 0
    %p106 = por %p104, %p105
    %s107 = ssub.s32 %s10, %s17
    %p108 = scmp.eq.s32.totalorder %s107, 0
    %s110 = sadd.s32 %s109, 1
    %s111 = scalar_select %p108, %s109, %s110
    %p114 = pneg %p108
    %p115 = scmp.eq.s32.totalorder %s10, 1
    %p116 = por %p114, %p115
    %p117 = scmp.ne.s32.totalorder %s109, %s112
    %p118 = scmp.eq.s32.totalorder %s10, 0
    %p119 = por %p117, %p118
    %p120 = scmp.ne.s32.totalorder %s109, %s112
    %p121 = scmp.eq.s32.totalorder %s15, 1
    %p122 = por %p120, %p121
    %p123 = scmp.ne.s32.totalorder %s112, %s113
    %p124 = scmp.eq.s32.totalorder %s15, 0
    %p125 = por %p123, %p124
    %p126 = scmp.ne.s32.totalorder %s112, %s113
    %p127 = scmp.eq.s32.totalorder %s16, 1
    %p128 = por %p126, %p127
    %p130 = scmp.ne.s32.totalorder %s113, %s129
    %p131 = scmp.eq.s32.totalorder %s16, 0
    %p132 = por %p130, %p131
    %p133 = scmp.le.s32.totalorder 1, %s10
    %p134 = scmp.lt.s32.totalorder %s10, 3
    %p135 = pnand %p133, %p134
    %p136 = pneg %p135
    // Predicated region
    $region9: #{vgae_forward.3} parent=5 // pred_check
      _
    $region10: #{vgae_forward.3} parent=5 // pred_check_branch
      %138 = sbr.rel (%p135) target = $region12
    $region11: #{vgae_forward.3} parent=5 // pred_region
      %s139 = ssub.s32 %s10, 1
      // Predicated region
      $region13: #{vgae_forward.3} parent=11 // pred_check
        %p140 = pneg %p57
      $region14: #{vgae_forward.3} parent=11 // pred_check_branch
        %142 = sbr.rel (%p140) target = $region16
      $region15: #{vgae_forward.3} parent=11 // pred_region
        _
      $region16: #{vgae_forward.3} parent=11 // pred_fallthru
        _
      // Predicated region
      $region17: #{vgae_forward.3} parent=11 // pred_check
        %p143 = pneg %p78
      $region18: #{vgae_forward.3} parent=11 // pred_check_branch
        %145 = sbr.rel (%p143) target = $region20
      $region19: #{vgae_forward.3} parent=11 // pred_region
        _
      $region20: #{vgae_forward.3} parent=11 // pred_fallthru
        _
      // Predicated region
      $region21: #{vgae_forward.3} parent=11 // pred_check
        %p146 = pneg %p99
      $region22: #{vgae_forward.3} parent=11 // pred_check_branch
        %148 = sbr.rel (%p146) target = $region24
      $region23: #{vgae_forward.3} parent=11 // pred_region
        _
      $region24: #{vgae_forward.3} parent=11 // pred_fallthru
        _
    $region12: #{vgae_forward.3} parent=5 // pred_fallthru
      _
    %p149 = scmp.lt.s32.totalorder %s10, 2
    // Predicated region
    $region25: #{vgae_forward.3} parent=5 // pred_check
      %p150 = pneg %p149
    $region26: #{vgae_forward.3} parent=5 // pred_check_branch
      %152 = sbr.rel (%p150) target = $region28
    $region27: #{vgae_forward.3} parent=5 // pred_region
      // Predicated region
      $region29: #{vgae_forward.3} parent=27 // pred_check
        %p153 = pneg %p30
      $region30: #{vgae_forward.3} parent=27 // pred_check_branch
        %155 = sbr.rel (%p153) target = $region32
      $region31: #{vgae_forward.3} parent=27 // pred_region
        %s156 = smul.u32 16, %s10
        %p157 = scmp.lt.s32.totalorder %s156, 31
        %s158 = scalar_select %p157, %s156, 31
        %s159 = smul.addr %s158, 2
        %s160 = smul.addr %s159, 4
        %s161 = scalar_lea.vmem %s0, %s160
        %s162 = smul.u32 16, %s10
      $region32: #{vgae_forward.3} parent=27 // pred_fallthru
        _
    $region28: #{vgae_forward.3} parent=5 // pred_fallthru
      _
    %p163 = scmp.le.s32.totalorder 1, %s10
    %p164 = scmp.lt.s32.totalorder %s10, 3
    %p165 = pnand %p163, %p164
    %p166 = pneg %p165
    // Predicated region
    $region33: #{vgae_forward.3} parent=5 // pred_check
      _
    $region34: #{vgae_forward.3} parent=5 // pred_check_branch
      %168 = sbr.rel (%p165) target = $region36
    $region35: #{vgae_forward.3} parent=5 // pred_region
      %s169 = ssub.s32 %s10, 1
      %s170 = smul.u32 16, %s15
      %p171 = scmp.lt.s32.totalorder %s170, 31
      %s172 = scalar_select %p171, %s170, 31
      %s173 = smul.addr %s172, 2
      %s174 = smul.addr %s173, 4
      %s175 = scalar_lea.vmem %s0, %s174
      %p176 = pneg %p36
      %p177 = pneg %p33
      %p178 = pneg %p57
      %p179 = pneg %p54
      %p180 = pneg %p78
      %p181 = pneg %p75
      %p182 = pneg %p99
      %p183 = pneg %p96
      %p184 = pneg %p125
      %p185 = pneg %p122
      %s186 = smul.u32 16, %s15
      %p187 = scmp.lt.s32.totalorder %s186, 31
      %s188 = scalar_select %p187, %s186, 31
      %s189 = smul.addr %s188, 4
      %s190 = scalar_lea.vmem %s4, %s189
      %s191 = smul.u32 16, %s15
      %p192 = scmp.lt.s32.totalorder %s191, 31
      %s193 = scalar_select %p192, %s191, 31
      %s194 = smul.addr %s193, 2
      %s195 = smul.addr %s194, 4
      %s196 = scalar_lea.vmem %s0, %s195
      %s197 = smul.u32 16, %s15
      %s198 = smul.u32 16, %s15
      %p199 = scmp.lt.s32.totalorder %s198, 31
      %s200 = scalar_select %p199, %s198, 31
      %s201 = smul.addr %s200, 4
      %s202 = scalar_lea.vmem %s4, %s201
      %s203 = smul.u32 16, %s15
      %v205 = vld [vmem:[%s1] sm:$0xf]
      %v206 = vld [vmem:[%s1 + $0x4] sm:$0xf]
      %v207 = vld [vmem:[%s1 + $0x8] sm:$0xf]
      %v208 = vld [vmem:[%s1 + $0xc] sm:$0xf]
      %v209 = vld [vmem:[%s1 + $0x10] sm:$0xf]
      %v210 = vld [vmem:[%s1 + $0x14] sm:$0xf]
      %v211 = vld [vmem:[%s1 + $0x18] sm:$0xf]
      %v212 = vld [vmem:[%s1 + $0x1c] sm:$0xf]
      %v213 = vld [vmem:[%s1 + $0x20] sm:$0xf]
      %v214 = vld [vmem:[%s1 + $0x24] sm:$0xf]
      %v215 = vld [vmem:[%s1 + $0x28] sm:$0xf]
      %v216 = vld [vmem:[%s1 + $0x2c] sm:$0xf]
      %v217 = vld [vmem:[%s1 + $0x30] sm:$0xf]
      %v218 = vld [vmem:[%s1 + $0x34] sm:$0xf]
      %v219 = vld [vmem:[%s1 + $0x38] sm:$0xf]
      %v220 = vld [vmem:[%s1 + $0x3c] sm:$0xf]
      %v221 = vld [vmem:[%s1 + $0x40] sm:$0xf]
      %v222 = vld [vmem:[%s1 + $0x44] sm:$0xf]
      %v223 = vld [vmem:[%s1 + $0x48] sm:$0xf]
      %v224 = vld [vmem:[%s1 + $0x4c] sm:$0xf]
      %v225 = vld [vmem:[%s1 + $0x50] sm:$0xf]
      %v226 = vld [vmem:[%s1 + $0x54] sm:$0xf]
      %v227 = vld [vmem:[%s1 + $0x58] sm:$0xf]
      %v228 = vld [vmem:[%s1 + $0x5c] sm:$0xf]
      %v229 = vld [vmem:[%s1 + $0x60] sm:$0xf]
      %v230 = vld [vmem:[%s1 + $0x64] sm:$0xf]
      %v231 = vld [vmem:[%s1 + $0x68] sm:$0xf]
      %v232 = vld [vmem:[%s1 + $0x6c] sm:$0xf]
      %v233 = vld [vmem:[%s1 + $0x70] sm:$0xf]
      %v234 = vld [vmem:[%s1 + $0x74] sm:$0xf]
      %v235 = vld [vmem:[%s1 + $0x78] sm:$0xf]
      %v236 = vld [vmem:[%s1 + $0x7c] sm:$0xf]
      %v237 = vld [vmem:[%s2] sm:$0xf]
      %v238 = vld [vmem:[%s2 + $0x4] sm:$0xf]
      %v239 = vld [vmem:[%s2 + $0x8] sm:$0xf]
      %v240 = vld [vmem:[%s2 + $0xc] sm:$0xf]
      %v273 = vunpack.c.l.b16 %v205
      %v274 = vunpack.c.l.b16 %v206
      %v275 = vunpack.c.l.b16 %v207
      %v276 = vunpack.c.l.b16 %v208
      %v277 = vunpack.c.l.b16 %v209
      %v278 = vunpack.c.l.b16 %v210
      %v279 = vunpack.c.l.b16 %v211
      %v280 = vunpack.c.l.b16 %v212
      %v281 = vunpack.c.l.b16 %v213
      %v282 = vunpack.c.l.b16 %v214
      %v283 = vunpack.c.l.b16 %v215
      %v284 = vunpack.c.l.b16 %v216
      %v285 = vunpack.c.l.b16 %v217
      %v286 = vunpack.c.l.b16 %v218
      %v287 = vunpack.c.l.b16 %v219
      %v288 = vunpack.c.l.b16 %v220
      %v289 = vunpack.c.l.b16 %v221
      %v290 = vunpack.c.l.b16 %v222
      %v291 = vunpack.c.l.b16 %v223
      %v292 = vunpack.c.l.b16 %v224
      %v293 = vunpack.c.l.b16 %v225
      %v294 = vunpack.c.l.b16 %v226
      %v295 = vunpack.c.l.b16 %v227
      %v296 = vunpack.c.l.b16 %v228
      %v297 = vunpack.c.l.b16 %v229
      %v298 = vunpack.c.l.b16 %v230
      %v299 = vunpack.c.l.b16 %v231
      %v300 = vunpack.c.l.b16 %v232
      %v301 = vunpack.c.l.b16 %v233
      %v302 = vunpack.c.l.b16 %v234
      %v303 = vunpack.c.l.b16 %v235
      %v304 = vunpack.c.l.b16 %v236
      %v305 = vpack.c.b16 %v274, %v273
      %v306 = vpack.c.b16 %v276, %v275
      %v307 = vpack.c.b16 %v278, %v277
      %v308 = vpack.c.b16 %v280, %v279
      %v309 = vpack.c.b16 %v282, %v281
      %v310 = vpack.c.b16 %v284, %v283
      %v311 = vpack.c.b16 %v286, %v285
      %v312 = vpack.c.b16 %v288, %v287
      %v313 = vpack.c.b16 %v290, %v289
      %v314 = vpack.c.b16 %v292, %v291
      %v315 = vpack.c.b16 %v294, %v293
      %v316 = vpack.c.b16 %v296, %v295
      %v317 = vpack.c.b16 %v298, %v297
      %v318 = vpack.c.b16 %v300, %v299
      %v319 = vpack.c.b16 %v302, %v301
      %v320 = vpack.c.b16 %v304, %v303
      %v325 = vunpack.c.l.b16 %v237
      %v326 = vunpack.c.l.b16 %v238
      %v327 = vunpack.c.l.b16 %v239
      %v328 = vunpack.c.l.b16 %v240
      %v329 = vpack.c.b16 %v326, %v325
      %v330 = vpack.c.b16 %v328, %v327
      %vm333 = vcmask 261120
      %v335 = vsel %vm333, %v305, 0
      %v338 = vsel %vm333, %v306, 0
      %v341 = vsel %vm333, %v307, 0
      %v344 = vsel %vm333, %v308, 0
      %v347 = vsel %vm333, %v309, 0
      %v350 = vsel %vm333, %v310, 0
      %v353 = vsel %vm333, %v311, 0
      %v356 = vsel %vm333, %v312, 0
      %v359 = vsel %vm333, %v313, 0
      %v362 = vsel %vm333, %v314, 0
      %v365 = vsel %vm333, %v315, 0
      %v368 = vsel %vm333, %v316, 0
      %v371 = vsel %vm333, %v317, 0
      %v374 = vsel %vm333, %v318, 0
      %v377 = vsel %vm333, %v319, 0
      %v380 = vsel %vm333, %v320, 0
      %382 = vmatprep.subr.bf16.mxu0 0
      %383 = vmatpush1.bf16.msra.mxu0 %v329
      %384 = vmatprep.subr.bf16.mxu0 0
      %385 = vmatpush1.bf16.msra.mxu0 %v330
      %386 = vmatprep.subr.bf16.mxu0 0
      %387 = vmatpush1.bf16.msra.mxu0 0
      %388 = vmatprep.subr.bf16.mxu0 0
      %389 = vmatpush1.bf16.msra.mxu0 0
      %390 = vmatprep.subr.bf16.mxu0 0
      %391 = vmatpush1.bf16.msra.mxu0 0
      %392 = vmatprep.subr.bf16.mxu0 0
      %393 = vmatpush1.bf16.msra.mxu0 0
      %394 = vmatprep.subr.bf16.mxu0 0
      %395 = vmatpush1.bf16.msra.mxu0 0
      %396 = vmatprep.subr.bf16.mxu0 0
      %397 = vmatpush1.bf16.msra.mxu0 0
      %398 = vmatprep.subr.bf16.mxu0 0
      %399 = vmatpush1.bf16.msra.mxu0 0
      %400 = vmatprep.subr.bf16.mxu0 0
      %401 = vmatpush1.bf16.msra.mxu0 0
      %402 = vmatprep.subr.bf16.mxu0 0
      %403 = vmatpush1.bf16.msra.mxu0 0
      %404 = vmatprep.subr.bf16.mxu0 0
      %405 = vmatpush1.bf16.msra.mxu0 0
      %406 = vmatprep.subr.bf16.mxu0 0
      %407 = vmatpush1.bf16.msra.mxu0 0
      %408 = vmatprep.subr.bf16.mxu0 0
      %409 = vmatpush1.bf16.msra.mxu0 0
      %410 = vmatprep.subr.bf16.mxu0 0
      %411 = vmatpush1.bf16.msra.mxu0 0
      %412 = vmatprep.subr.bf16.mxu0 0
      %413 = vmatpush1.bf16.msra.mxu0 0
      %414 = vmatprep.mubr.bf16.mxu0 0
      %415 = vmatmul.mubr.bf16.gmra.mrb[0].mxu0 %v335
      %v416 = vpop.f32.mrb[0].mxu0
      %v417 = vadd.f32 0.0, %v416
      %v418 = vpop.f32.mrb[0].mxu0
      %v419 = vpop.f32.mrb[0].mxu0
      %v420 = vadd.f32 0.0, %v419
      %v421 = vpop.f32.mrb[0].mxu0
      %422 = vmatprep.mubr.bf16.mxu0 0
      %423 = vmatmul.mubr.bf16.gmra.mrb[0].mxu0 %v338
      %v424 = vpop.f32.mrb[0].mxu0
      %v425 = vadd.f32 0.0, %v424
      %v426 = vpop.f32.mrb[0].mxu0
      %v427 = vpop.f32.mrb[0].mxu0
      %v428 = vadd.f32 0.0, %v427
      %v429 = vpop.f32.mrb[0].mxu0
      %430 = vmatprep.mubr.bf16.mxu0 0
      %431 = vmatmul.mubr.bf16.gmra.mrb[0].mxu0 %v341
      %v432 = vpop.f32.mrb[0].mxu0
      %v433 = vadd.f32 0.0, %v432
      %v434 = vpop.f32.mrb[0].mxu0
      %v435 = vpop.f32.mrb[0].mxu0
      %v436 = vadd.f32 0.0, %v435
      %v437 = vpop.f32.mrb[0].mxu0
      %438 = vmatprep.mubr.bf16.mxu0 0
      %439 = vmatmul.mubr.bf16.gmra.mrb[0].mxu0 %v344
      %v440 = vpop.f32.mrb[0].mxu0
      %v441 = vadd.f32 0.0, %v440
      %v442 = vpop.f32.mrb[0].mxu0
      %v443 = vpop.f32.mrb[0].mxu0
      %v444 = vadd.f32 0.0, %v443
      %v445 = vpop.f32.mrb[0].mxu0
      %446 = vmatprep.mubr.bf16.mxu0 0
      %447 = vmatmul.mubr.bf16.gmra.mrb[0].mxu0 %v347
      %v448 = vpop.f32.mrb[0].mxu0
      %v449 = vadd.f32 0.0, %v448
      %v450 = vpop.f32.mrb[0].mxu0
      %v451 = vpop.f32.mrb[0].mxu0
      %v452 = vadd.f32 0.0, %v451
      %v453 = vpop.f32.mrb[0].mxu0
      %454 = vmatprep.mubr.bf16.mxu0 0
      %455 = vmatmul.mubr.bf16.gmra.mrb[0].mxu0 %v350
      %v456 = vpop.f32.mrb[0].mxu0
      %v457 = vadd.f32 0.0, %v456
      %v458 = vpop.f32.mrb[0].mxu0
      %v459 = vpop.f32.mrb[0].mxu0
      %v460 = vadd.f32 0.0, %v459
      %v461 = vpop.f32.mrb[0].mxu0
      %462 = vmatprep.mubr.bf16.mxu0 0
      %463 = vmatmul.mubr.bf16.gmra.mrb[0].mxu0 %v353
      %v464 = vpop.f32.mrb[0].mxu0
      %v465 = vadd.f32 0.0, %v464
      %v466 = vpop.f32.mrb[0].mxu0
      %v467 = vpop.f32.mrb[0].mxu0
      %v468 = vadd.f32 0.0, %v467
      %v469 = vpop.f32.mrb[0].mxu0
      %470 = vmatprep.mubr.bf16.mxu0 0
      %471 = vmatmul.mubr.bf16.gmra.mrb[0].mxu0 %v356
      %v472 = vpop.f32.mrb[0].mxu0
      %v473 = vadd.f32 0.0, %v472
      %v474 = vpop.f32.mrb[0].mxu0
      %v475 = vpop.f32.mrb[0].mxu0
      %v476 = vadd.f32 0.0, %v475
      %v477 = vpop.f32.mrb[0].mxu0
      %478 = vmatprep.mubr.bf16.mxu0 0
      %479 = vmatmul.mubr.bf16.gmra.mrb[0].mxu0 %v359
      %v480 = vpop.f32.mrb[0].mxu0
      %v481 = vadd.f32 0.0, %v480
      %v482 = vpop.f32.mrb[0].mxu0
      %v483 = vpop.f32.mrb[0].mxu0
      %v484 = vadd.f32 0.0, %v483
      %v485 = vpop.f32.mrb[0].mxu0
      %486 = vmatprep.mubr.bf16.mxu0 0
      %487 = vmatmul.mubr.bf16.gmra.mrb[0].mxu0 %v362
      %v488 = vpop.f32.mrb[0].mxu0
      %v489 = vadd.f32 0.0, %v488
      %v490 = vpop.f32.mrb[0].mxu0
      %v491 = vpop.f32.mrb[0].mxu0
      %v492 = vadd.f32 0.0, %v491
      %v493 = vpop.f32.mrb[0].mxu0
      %494 = vmatprep.mubr.bf16.mxu0 0
      %495 = vmatmul.mubr.bf16.gmra.mrb[0].mxu0 %v365
      %v496 = vpop.f32.mrb[0].mxu0
      %v497 = vadd.f32 0.0, %v496
      %v498 = vpop.f32.mrb[0].mxu0
      %v499 = vpop.f32.mrb[0].mxu0
      %v500 = vadd.f32 0.0, %v499
      %v501 = vpop.f32.mrb[0].mxu0
      %502 = vmatprep.mubr.bf16.mxu0 0
      %503 = vmatmul.mubr.bf16.gmra.mrb[0].mxu0 %v368
      %v504 = vpop.f32.mrb[0].mxu0
      %v505 = vadd.f32 0.0, %v504
      %v506 = vpop.f32.mrb[0].mxu0
      %v507 = vpop.f32.mrb[0].mxu0
      %v508 = vadd.f32 0.0, %v507
      %v509 = vpop.f32.mrb[0].mxu0
      %510 = vmatprep.mubr.bf16.mxu0 0
      %511 = vmatmul.mubr.bf16.gmra.mrb[0].mxu0 %v371
      %v512 = vpop.f32.mrb[0].mxu0
      %v513 = vadd.f32 0.0, %v512
      %v514 = vpop.f32.mrb[0].mxu0
      %v515 = vpop.f32.mrb[0].mxu0
      %v516 = vadd.f32 0.0, %v515
      %v517 = vpop.f32.mrb[0].mxu0
      %518 = vmatprep.mubr.bf16.mxu0 0
      %519 = vmatmul.mubr.bf16.gmra.mrb[0].mxu0 %v374
      %v520 = vpop.f32.mrb[0].mxu0
      %v521 = vadd.f32 0.0, %v520
      %v522 = vpop.f32.mrb[0].mxu0
      %v523 = vpop.f32.mrb[0].mxu0
      %v524 = vadd.f32 0.0, %v523
      %v525 = vpop.f32.mrb[0].mxu0
      %526 = vmatprep.mubr.bf16.mxu0 0
      %527 = vmatmul.mubr.bf16.gmra.mrb[0].mxu0 %v377
      %v528 = vpop.f32.mrb[0].mxu0
      %v529 = vadd.f32 0.0, %v528
      %v530 = vpop.f32.mrb[0].mxu0
      %v531 = vpop.f32.mrb[0].mxu0
      %v532 = vadd.f32 0.0, %v531
      %v533 = vpop.f32.mrb[0].mxu0
      %534 = vmatprep.mubr.bf16.mxu0 0
      %535 = vmatmul.mubr.bf16.gmra.mrb[0].mxu0 %v380
      %v536 = vpop.f32.mrb[0].mxu0
      %v537 = vadd.f32 0.0, %v536
      %v538 = vpop.f32.mrb[0].mxu0
      %v539 = vpop.f32.mrb[0].mxu0
      %v540 = vadd.f32 0.0, %v539
      %v541 = vpop.f32.mrb[0].mxu0
      %542 = vdwg.mxu0
      %v543 = vld [vmem:[%s196] sm:$0xff]
      %v544 = vld [vmem:[%s196 + $0x8] sm:$0xff]
      %v545 = vld [vmem:[%s196 + $0x10] sm:$0xff]
      %v546 = vld [vmem:[%s196 + $0x18] sm:$0xff]
      %v547 = vld [vmem:[%s196 + $0x20] sm:$0xff]
      %v548 = vld [vmem:[%s196 + $0x28] sm:$0xff]
      %v549 = vld [vmem:[%s196 + $0x30] sm:$0xff]
      %v550 = vld [vmem:[%s196 + $0x38] sm:$0xff]
      %v551 = vld [vmem:[%s196 + $0x40] sm:$0xff]
      %v552 = vld [vmem:[%s196 + $0x48] sm:$0xff]
      %v553 = vld [vmem:[%s196 + $0x50] sm:$0xff]
      %v554 = vld [vmem:[%s196 + $0x58] sm:$0xff]
      %v555 = vld [vmem:[%s196 + $0x60] sm:$0xff]
      %v556 = vld [vmem:[%s196 + $0x68] sm:$0xff]
      %v557 = vld [vmem:[%s196 + $0x70] sm:$0xff]
      %v558 = vld [vmem:[%s196 + $0x78] sm:$0xff]
      %v559 = vpack.c.bf16 %v420, %v417
      %v560 = vpack.c.bf16 %v428, %v425
      %v561 = vpack.c.bf16 %v436, %v433
      %v562 = vpack.c.bf16 %v444, %v441
      %v563 = vpack.c.bf16 %v452, %v449
      %v564 = vpack.c.bf16 %v460, %v457
      %v565 = vpack.c.bf16 %v468, %v465
      %v566 = vpack.c.bf16 %v476, %v473
      %v567 = vpack.c.bf16 %v484, %v481
      %v568 = vpack.c.bf16 %v492, %v489
      %v569 = vpack.c.bf16 %v500, %v497
      %v570 = vpack.c.bf16 %v508, %v505
      %v571 = vpack.c.bf16 %v516, %v513
      %v572 = vpack.c.bf16 %v524, %v521
      %v573 = vpack.c.bf16 %v532, %v529
      %v574 = vpack.c.bf16 %v540, %v537
      %v575 = vld [vmem:[%s3] sm:$0x1]
      %v577 = vlaneseq
      %v578 = vshrl.u32 %v577, 7
      %v579 = vsub.s32 0, %v578
      %v580 = vrot.slane %v575, %v579
      %v598 = vunpack.c.l.b16 %v543
      %v599 = vunpack.c.h.b16 %v543
      %v600 = vunpack.c.l.b16 %v544
      %v601 = vunpack.c.h.b16 %v544
      %v602 = vunpack.c.l.b16 %v545
      %v603 = vunpack.c.h.b16 %v545
      %v604 = vunpack.c.l.b16 %v546
      %v605 = vunpack.c.h.b16 %v546
      %v606 = vunpack.c.l.b16 %v547
      %v607 = vunpack.c.h.b16 %v547
      %v608 = vunpack.c.l.b16 %v548
      %v609 = vunpack.c.h.b16 %v548
      %v610 = vunpack.c.l.b16 %v549
      %v611 = vunpack.c.h.b16 %v549
      %v612 = vunpack.c.l.b16 %v550
      %v613 = vunpack.c.h.b16 %v550
      %v614 = vunpack.c.l.b16 %v551
      %v615 = vunpack.c.h.b16 %v551
      %v616 = vunpack.c.l.b16 %v552
      %v617 = vunpack.c.h.b16 %v552
      %v618 = vunpack.c.l.b16 %v553
      %v619 = vunpack.c.h.b16 %v553
      %v620 = vunpack.c.l.b16 %v554
      %v621 = vunpack.c.h.b16 %v554
      %v622 = vunpack.c.l.b16 %v555
      %v623 = vunpack.c.h.b16 %v555
      %v624 = vunpack.c.l.b16 %v556
      %v625 = vunpack.c.h.b16 %v556
      %v626 = vunpack.c.l.b16 %v557
      %v627 = vunpack.c.h.b16 %v557
      %v628 = vunpack.c.l.b16 %v558
      %v629 = vunpack.c.h.b16 %v558
      %v630 = vpack.c.b16 %v600, %v598
      %v631 = vpack.c.b16 %v601, %v599
      %v632 = vpack.c.b16 %v604, %v602
      %v633 = vpack.c.b16 %v605, %v603
      %v634 = vpack.c.b16 %v608, %v606
      %v635 = vpack.c.b16 %v609, %v607
      %v636 = vpack.c.b16 %v612, %v610
      %v637 = vpack.c.b16 %v613, %v611
      %v638 = vpack.c.b16 %v616, %v614
      %v639 = vpack.c.b16 %v617, %v615
      %v640 = vpack.c.b16 %v620, %v618
      %v641 = vpack.c.b16 %v621, %v619
      %v642 = vpack.c.b16 %v624, %v622
      %v643 = vpack.c.b16 %v625, %v623
      %v644 = vpack.c.b16 %v628, %v626
      %v645 = vpack.c.b16 %v629, %v627
      %662 = vmatprep.subr.bf16.mxu0 0
      %663 = vmatpush1.bf16.msra.mxu0 %v559
      %664 = vmatprep.subr.bf16.mxu0 0
      %665 = vmatpush1.bf16.msra.mxu0 %v560
      %666 = vmatprep.subr.bf16.mxu0 0
      %667 = vmatpush1.bf16.msra.mxu0 %v561
      %668 = vmatprep.subr.bf16.mxu0 0
      %669 = vmatpush1.bf16.msra.mxu0 %v562
      %670 = vmatprep.subr.bf16.mxu0 0
      %671 = vmatpush1.bf16.msra.mxu0 %v563
      %672 = vmatprep.subr.bf16.mxu0 0
      %673 = vmatpush1.bf16.msra.mxu0 %v564
      %674 = vmatprep.subr.bf16.mxu0 0
      %675 = vmatpush1.bf16.msra.mxu0 %v565
      %676 = vmatprep.subr.bf16.mxu0 0
      %677 = vmatpush1.bf16.msra.mxu0 %v566
      %678 = vmatprep.subr.bf16.mxu0 0
      %679 = vmatpush1.bf16.msra.mxu0 %v567
      %680 = vmatprep.subr.bf16.mxu0 0
      %681 = vmatpush1.bf16.msra.mxu0 %v568
      %682 = vmatprep.subr.bf16.mxu0 0
      %683 = vmatpush1.bf16.msra.mxu0 %v569
      %684 = vmatprep.subr.bf16.mxu0 0
      %685 = vmatpush1.bf16.msra.mxu0 %v570
      %686 = vmatprep.subr.bf16.mxu0 0
      %687 = vmatpush1.bf16.msra.mxu0 %v571
      %688 = vmatprep.subr.bf16.mxu0 0
      %689 = vmatpush1.bf16.msra.mxu0 %v572
      %690 = vmatprep.subr.bf16.mxu0 0
      %691 = vmatpush1.bf16.msra.mxu0 %v573
      %692 = vmatprep.subr.bf16.mxu0 0
      %693 = vmatpush1.bf16.msra.mxu0 %v574
      %694 = vmatprep.mubr.bf16.mxu0 %v631
      %695 = vmatmul.mubr.bf16.gmra.mrb[0].mxu0 %v630
      %v696 = vpop.f32.mrb[0].mxu0
      %v697 = vadd.f32 %v580, %v696
      %v698 = vpop.f32.mrb[0].mxu0
      %v699 = vpop.f32.mrb[0].mxu0
      %v700 = vadd.f32 %v580, %v699
      %v701 = vpop.f32.mrb[0].mxu0
      %702 = vmatprep.mubr.bf16.mxu0 %v633
      %703 = vmatmul.mubr.bf16.gmra.mrb[0].mxu0 %v632
      %v704 = vpop.f32.mrb[0].mxu0
      %v705 = vadd.f32 %v580, %v704
      %v706 = vpop.f32.mrb[0].mxu0
      %v707 = vpop.f32.mrb[0].mxu0
      %v708 = vadd.f32 %v580, %v707
      %v709 = vpop.f32.mrb[0].mxu0
      %710 = vmatprep.mubr.bf16.mxu0 %v635
      %711 = vmatmul.mubr.bf16.gmra.mrb[0].mxu0 %v634
      %v712 = vpop.f32.mrb[0].mxu0
      %v713 = vadd.f32 %v580, %v712
      %v714 = vpop.f32.mrb[0].mxu0
      %v715 = vpop.f32.mrb[0].mxu0
      %v716 = vadd.f32 %v580, %v715
      %v717 = vpop.f32.mrb[0].mxu0
      %718 = vmatprep.mubr.bf16.mxu0 %v637
      %719 = vmatmul.mubr.bf16.gmra.mrb[0].mxu0 %v636
      %v720 = vpop.f32.mrb[0].mxu0
      %v721 = vadd.f32 %v580, %v720
      %v722 = vpop.f32.mrb[0].mxu0
      %v723 = vpop.f32.mrb[0].mxu0
      %v724 = vadd.f32 %v580, %v723
      %v725 = vpop.f32.mrb[0].mxu0
      %726 = vmatprep.mubr.bf16.mxu0 %v639
      %727 = vmatmul.mubr.bf16.gmra.mrb[0].mxu0 %v638
      %v728 = vpop.f32.mrb[0].mxu0
      %v729 = vadd.f32 %v580, %v728
      %v730 = vpop.f32.mrb[0].mxu0
      %v731 = vpop.f32.mrb[0].mxu0
      %v732 = vadd.f32 %v580, %v731
      %v733 = vpop.f32.mrb[0].mxu0
      %734 = vmatprep.mubr.bf16.mxu0 %v641
      %735 = vmatmul.mubr.bf16.gmra.mrb[0].mxu0 %v640
      %v736 = vpop.f32.mrb[0].mxu0
      %v737 = vadd.f32 %v580, %v736
      %v738 = vpop.f32.mrb[0].mxu0
      %v739 = vpop.f32.mrb[0].mxu0
      %v740 = vadd.f32 %v580, %v739
      %v741 = vpop.f32.mrb[0].mxu0
      %742 = vmatprep.mubr.bf16.mxu0 %v643
      %743 = vmatmul.mubr.bf16.gmra.mrb[0].mxu0 %v642
      %v744 = vpop.f32.mrb[0].mxu0
      %v745 = vadd.f32 %v580, %v744
      %v746 = vpop.f32.mrb[0].mxu0
      %v747 = vpop.f32.mrb[0].mxu0
      %v748 = vadd.f32 %v580, %v747
      %v749 = vpop.f32.mrb[0].mxu0
      %750 = vmatprep.mubr.bf16.mxu0 %v645
      %751 = vmatmul.mubr.bf16.gmra.mrb[0].mxu0 %v644
      %v752 = vpop.f32.mrb[0].mxu0
      %v753 = vadd.f32 %v580, %v752
      %v754 = vpop.f32.mrb[0].mxu0
      %v755 = vpop.f32.mrb[0].mxu0
      %v756 = vadd.f32 %v580, %v755
      %v757 = vpop.f32.mrb[0].mxu0
      %758 = vdwg.mxu0
      %v759 = vmax.f32 %v697, 0.0
      %v760 = vmax.f32 %v700, 0.0
      %v761 = vmax.f32 %v705, 0.0
      %v762 = vmax.f32 %v708, 0.0
      %v763 = vmax.f32 %v713, 0.0
      %v764 = vmax.f32 %v716, 0.0
      %v765 = vmax.f32 %v721, 0.0
      %v766 = vmax.f32 %v724, 0.0
      %v767 = vmax.f32 %v729, 0.0
      %v768 = vmax.f32 %v732, 0.0
      %v769 = vmax.f32 %v737, 0.0
      %v770 = vmax.f32 %v740, 0.0
      %v771 = vmax.f32 %v745, 0.0
      %v772 = vmax.f32 %v748, 0.0
      %v773 = vmax.f32 %v753, 0.0
      %v774 = vmax.f32 %v756, 0.0
      %v775 = vpack.c.bf16 %v760, %v759
      %v776 = vpack.c.bf16 %v762, %v761
      %v777 = vpack.c.bf16 %v764, %v763
      %v778 = vpack.c.bf16 %v766, %v765
      %v779 = vpack.c.bf16 %v768, %v767
      %v780 = vpack.c.bf16 %v770, %v769
      %v781 = vpack.c.bf16 %v772, %v771
      %v782 = vpack.c.bf16 %v774, %v773
      %v791 = vunpack.c.l.b16 %v775
      %v792 = vunpack.c.h.b16 %v775
      %v793 = vunpack.c.l.b16 %v776
      %v794 = vunpack.c.h.b16 %v776
      %v795 = vunpack.c.l.b16 %v777
      %v796 = vunpack.c.h.b16 %v777
      %v797 = vunpack.c.l.b16 %v778
      %v798 = vunpack.c.h.b16 %v778
      %v799 = vunpack.c.l.b16 %v779
      %v800 = vunpack.c.h.b16 %v779
      %v801 = vunpack.c.l.b16 %v780
      %v802 = vunpack.c.h.b16 %v780
      %v803 = vunpack.c.l.b16 %v781
      %v804 = vunpack.c.h.b16 %v781
      %v805 = vunpack.c.l.b16 %v782
      %v806 = vunpack.c.h.b16 %v782
      %v807 = vpack.c.b16 %v791, %v791
      %v808 = vpack.c.b16 %v792, %v792
      %v809 = vpack.c.b16 %v793, %v793
      %v810 = vpack.c.b16 %v794, %v794
      %v811 = vpack.c.b16 %v795, %v795
      %v812 = vpack.c.b16 %v796, %v796
      %v813 = vpack.c.b16 %v797, %v797
      %v814 = vpack.c.b16 %v798, %v798
      %v815 = vpack.c.b16 %v799, %v799
      %v816 = vpack.c.b16 %v800, %v800
      %v817 = vpack.c.b16 %v801, %v801
      %v818 = vpack.c.b16 %v802, %v802
      %v819 = vpack.c.b16 %v803, %v803
      %v820 = vpack.c.b16 %v804, %v804
      %v821 = vpack.c.b16 %v805, %v805
      %v822 = vpack.c.b16 %v806, %v806
      %839 = vst [vmem:[%s202] sm:$0xf] %v807
      %840 = vst [vmem:[%s202 + $0x4] sm:$0xf] %v808
      %841 = vst [vmem:[%s202 + $0x8] sm:$0xf] %v809
      %842 = vst [vmem:[%s202 + $0xc] sm:$0xf] %v810
      %843 = vst [vmem:[%s202 + $0x10] sm:$0xf] %v811
      %844 = vst [vmem:[%s202 + $0x14] sm:$0xf] %v812
      %845 = vst [vmem:[%s202 + $0x18] sm:$0xf] %v813
      %846 = vst [vmem:[%s202 + $0x1c] sm:$0xf] %v814
      %847 = vst [vmem:[%s202 + $0x20] sm:$0xf] %v815
      %848 = vst [vmem:[%s202 + $0x24] sm:$0xf] %v816
      %849 = vst [vmem:[%s202 + $0x28] sm:$0xf] %v817
      %850 = vst [vmem:[%s202 + $0x2c] sm:$0xf] %v818
      %851 = vst [vmem:[%s202 + $0x30] sm:$0xf] %v819
      %852 = vst [vmem:[%s202 + $0x34] sm:$0xf] %v820
      %853 = vst [vmem:[%s202 + $0x38] sm:$0xf] %v821
      %854 = vst [vmem:[%s202 + $0x3c] sm:$0xf] %v822
      %s855 = smul.u32 16, %s15
      %p856 = scmp.lt.s32.totalorder %s855, 31
      %s857 = scalar_select %p856, %s855, 31
      %s858 = smul.addr %s857, 4
      %s859 = scalar_lea.vmem %s4, %s858
      // Predicated region
      $region37: #{vgae_forward.3} parent=35 // pred_check
        %p860 = pneg %p122
      $region38: #{vgae_forward.3} parent=35 // pred_check_branch
        %862 = sbr.rel (%p860) target = $region40
      $region39: #{vgae_forward.3} parent=35 // pred_region
        %s863 = smul.u32 16, %s15
      $region40: #{vgae_forward.3} parent=35 // pred_fallthru
        _
    $region36: #{vgae_forward.3} parent=5 // pred_fallthru
      _
    %p864 = scmp.le.s32.totalorder 2, %s10
    // Predicated region
    $region41: #{vgae_forward.3} parent=5 // pred_check
      %p865 = pneg %p864
    $region42: #{vgae_forward.3} parent=5 // pred_check_branch
      %867 = sbr.rel (%p865) target = $region44
    $region43: #{vgae_forward.3} parent=5 // pred_region
      %s868 = ssub.s32 %s10, 2
      // Predicated region
      $region45: #{vgae_forward.3} parent=43 // pred_check
        %p869 = pneg %p128
      $region46: #{vgae_forward.3} parent=43 // pred_check_branch
        %871 = sbr.rel (%p869) target = $region48
      $region47: #{vgae_forward.3} parent=43 // pred_region
        %s872 = smul.u32 16, %s16
        %p873 = scmp.lt.s32.totalorder %s872, 31
        %s874 = scalar_select %p873, %s872, 31
        %s875 = smul.addr %s874, 4
        %s876 = scalar_lea.vmem %s4, %s875
      $region48: #{vgae_forward.3} parent=43 // pred_fallthru
        _
    $region44: #{vgae_forward.3} parent=5 // pred_fallthru
      _
  $region6: #{vgae_forward.3} parent=0 // loop_footer
    %s14 = sadd.s32 1, %s10
  $region7: #{vgae_forward.3} parent=0 // loop_footer_branch
    %9 = sbr.rel target = $region3
  $region8: #{vgae_forward.3} parent=0 // loop_exit
    _

// kernel: vgae_forward.4
$region0: #{vgae_forward.4}
  #allocation0 [shape = 'u32[]', space=smem, size = 0x4, offset = 0x4, fixed_abs, tag = 'smem constant byte address 0x4 - core index']
  #allocation1 [shape = 'u32[144,128]{1,0:T(1,128)}', space=vmem, size = 0x12000, scoped, tag = 'internal scratch']
  %s0 = inlined_call_operand.vmem [shape: bf16[256,256], index: 0, kind: input, shape index: {}]
  %s1 = inlined_call_operand.vmem [shape: bf16[256,128], index: 1, kind: input, shape index: {}]
  %s2 = inlined_call_operand.vmem [shape: bf16[128,256], index: 2, kind: input, shape index: {}]
  %s3 = inlined_call_operand.vmem [shape: f32[1,256], index: 3, kind: input, shape index: {}]
  %s4 = inlined_call_operand.vmem [shape: f32[256,128], index: 4, kind: input, shape index: {}]
  %s5 = inlined_call_operand.vmem [shape: bf16[256,128], index: 5, kind: output, shape index: {}]
  %s6 = sld [smem:[#allocation0]]
  $region53: #{vgae_forward.4} parent=0
    _
  %s8 = ssub.s32 1, %s6
  %s9 = scalar_select 0, %s8, %s6
  loop: start=0, step=1, limit=4
  $region2: #{vgae_forward.4} parent=0 // loop_pre_header
    _
  $region3: #{vgae_forward.4} parent=0 // loop_header
    %s11 = sphi 0, %s15
    %p12 = scmp.ge.s32.totalorder %s11, 4
    %s21 = sphi 0, %s23
    %s24 = sphi 0, %s21
    %s25 = sphi 0, %s24
    %s41 = sphi 0, %s25
    %s45 = sphi 0, %s45
    %s47 = sphi 0, %s45
    %s48 = sphi 0, %s47
    %s62 = sphi 0, %s48
    %s66 = sphi 0, %s66
    %s68 = sphi 0, %s66
    %s69 = sphi 0, %s68
    %s83 = sphi 0, %s69
    %s87 = sphi 0, %s87
    %s89 = sphi 0, %s87
    %s90 = sphi 0, %s89
    %s104 = sphi 0, %s90
    %s110 = sphi 0, %s112
    %s113 = sphi 0, %s110
    %s114 = sphi 0, %s113
    %s130 = sphi 0, %s114
    %s136 = sphi 0, %s138
    %s139 = sphi 0, %s136
    %s140 = sphi 0, %s139
    %s156 = sphi 0, %s140
  $region4: #{vgae_forward.4} parent=0 // loop_header_branch
    %14 = sbr.rel (%p12) target = $region8
  $region5: #{vgae_forward.4} parent=0 // loop_body
    %s16 = ssub.s32 %s11, 1
    %s17 = ssub.s32 %s11, 2
    %s18 = sadd.s32 %s11, 1
    %s19 = ssub.s32 %s11, %s18
    %p20 = scmp.eq.s32.totalorder %s19, 0
    %s22 = sadd.s32 %s21, 1
    %s23 = scalar_select %p20, %s21, %s22
    %p26 = pneg %p20
    %p27 = scmp.eq.s32.totalorder %s11, 1
    %p28 = por %p26, %p27
    %p29 = scmp.ne.s32.totalorder %s21, %s24
    %p30 = scmp.eq.s32.totalorder %s11, 0
    %p31 = por %p29, %p30
    %p32 = scmp.ne.s32.totalorder %s21, %s24
    %p33 = scmp.eq.s32.totalorder %s16, 1
    %p34 = por %p32, %p33
    %p35 = scmp.ne.s32.totalorder %s24, %s25
    %p36 = scmp.eq.s32.totalorder %s16, 0
    %p37 = por %p35, %p36
    %p38 = scmp.ne.s32.totalorder %s24, %s25
    %p39 = scmp.eq.s32.totalorder %s17, 1
    %p40 = por %p38, %p39
    %p42 = scmp.ne.s32.totalorder %s25, %s41
    %p43 = scmp.eq.s32.totalorder %s17, 0
    %p44 = por %p42, %p43
    %s46 = sadd.s32 %s45, 1
    %p49 = scmp.eq.s32.totalorder %s11, 1
    %p50 = scmp.ne.s32.totalorder %s45, %s47
    %p51 = scmp.eq.s32.totalorder %s11, 0
    %p52 = por %p50, %p51
    %p53 = scmp.ne.s32.totalorder %s45, %s47
    %p54 = scmp.eq.s32.totalorder %s16, 1
    %p55 = por %p53, %p54
    %p56 = scmp.ne.s32.totalorder %s47, %s48
    %p57 = scmp.eq.s32.totalorder %s16, 0
    %p58 = por %p56, %p57
    %p59 = scmp.ne.s32.totalorder %s47, %s48
    %p60 = scmp.eq.s32.totalorder %s17, 1
    %p61 = por %p59, %p60
    %p63 = scmp.ne.s32.totalorder %s48, %s62
    %p64 = scmp.eq.s32.totalorder %s17, 0
    %p65 = por %p63, %p64
    %s67 = sadd.s32 %s66, 1
    %p70 = scmp.eq.s32.totalorder %s11, 1
    %p71 = scmp.ne.s32.totalorder %s66, %s68
    %p72 = scmp.eq.s32.totalorder %s11, 0
    %p73 = por %p71, %p72
    %p74 = scmp.ne.s32.totalorder %s66, %s68
    %p75 = scmp.eq.s32.totalorder %s16, 1
    %p76 = por %p74, %p75
    %p77 = scmp.ne.s32.totalorder %s68, %s69
    %p78 = scmp.eq.s32.totalorder %s16, 0
    %p79 = por %p77, %p78
    %p80 = scmp.ne.s32.totalorder %s68, %s69
    %p81 = scmp.eq.s32.totalorder %s17, 1
    %p82 = por %p80, %p81
    %p84 = scmp.ne.s32.totalorder %s69, %s83
    %p85 = scmp.eq.s32.totalorder %s17, 0
    %p86 = por %p84, %p85
    %s88 = sadd.s32 %s87, 1
    %p91 = scmp.eq.s32.totalorder %s11, 1
    %p92 = scmp.ne.s32.totalorder %s87, %s89
    %p93 = scmp.eq.s32.totalorder %s11, 0
    %p94 = por %p92, %p93
    %p95 = scmp.ne.s32.totalorder %s87, %s89
    %p96 = scmp.eq.s32.totalorder %s16, 1
    %p97 = por %p95, %p96
    %p98 = scmp.ne.s32.totalorder %s89, %s90
    %p99 = scmp.eq.s32.totalorder %s16, 0
    %p100 = por %p98, %p99
    %p101 = scmp.ne.s32.totalorder %s89, %s90
    %p102 = scmp.eq.s32.totalorder %s17, 1
    %p103 = por %p101, %p102
    %p105 = scmp.ne.s32.totalorder %s90, %s104
    %p106 = scmp.eq.s32.totalorder %s17, 0
    %p107 = por %p105, %p106
    %s108 = ssub.s32 %s11, %s18
    %p109 = scmp.eq.s32.totalorder %s108, 0
    %s111 = sadd.s32 %s110, 1
    %s112 = scalar_select %p109, %s110, %s111
    %p115 = pneg %p109
    %p116 = scmp.eq.s32.totalorder %s11, 1
    %p117 = por %p115, %p116
    %p118 = scmp.ne.s32.totalorder %s110, %s113
    %p119 = scmp.eq.s32.totalorder %s11, 0
    %p120 = por %p118, %p119
    %p121 = scmp.ne.s32.totalorder %s110, %s113
    %p122 = scmp.eq.s32.totalorder %s16, 1
    %p123 = por %p121, %p122
    %p124 = scmp.ne.s32.totalorder %s113, %s114
    %p125 = scmp.eq.s32.totalorder %s16, 0
    %p126 = por %p124, %p125
    %p127 = scmp.ne.s32.totalorder %s113, %s114
    %p128 = scmp.eq.s32.totalorder %s17, 1
    %p129 = por %p127, %p128
    %p131 = scmp.ne.s32.totalorder %s114, %s130
    %p132 = scmp.eq.s32.totalorder %s17, 0
    %p133 = por %p131, %p132
    %s134 = ssub.s32 %s11, %s18
    %p135 = scmp.eq.s32.totalorder %s134, 0
    %s137 = sadd.s32 %s136, 1
    %s138 = scalar_select %p135, %s136, %s137
    %p141 = pneg %p135
    %p142 = scmp.eq.s32.totalorder %s11, 1
    %p143 = por %p141, %p142
    %p144 = scmp.ne.s32.totalorder %s136, %s139
    %p145 = scmp.eq.s32.totalorder %s11, 0
    %p146 = por %p144, %p145
    %p147 = scmp.ne.s32.totalorder %s136, %s139
    %p148 = scmp.eq.s32.totalorder %s16, 1
    %p149 = por %p147, %p148
    %p150 = scmp.ne.s32.totalorder %s139, %s140
    %p151 = scmp.eq.s32.totalorder %s16, 0
    %p152 = por %p150, %p151
    %p153 = scmp.ne.s32.totalorder %s139, %s140
    %p154 = scmp.eq.s32.totalorder %s17, 1
    %p155 = por %p153, %p154
    %p157 = scmp.ne.s32.totalorder %s140, %s156
    %p158 = scmp.eq.s32.totalorder %s17, 0
    %p159 = por %p157, %p158
    %p160 = scmp.le.s32.totalorder 1, %s11
    %p161 = scmp.lt.s32.totalorder %s11, 3
    %p162 = pnand %p160, %p161
    %p163 = pneg %p162
    // Predicated region
    $region9: #{vgae_forward.4} parent=5 // pred_check
      _
    $region10: #{vgae_forward.4} parent=5 // pred_check_branch
      %165 = sbr.rel (%p162) target = $region12
    $region11: #{vgae_forward.4} parent=5 // pred_region
      %s166 = ssub.s32 %s11, 1
      // Predicated region
      $region13: #{vgae_forward.4} parent=11 // pred_check
        %p167 = pneg %p58
      $region14: #{vgae_forward.4} parent=11 // pred_check_branch
        %169 = sbr.rel (%p167) target = $region16
      $region15: #{vgae_forward.4} parent=11 // pred_region
        _
      $region16: #{vgae_forward.4} parent=11 // pred_fallthru
        _
      // Predicated region
      $region17: #{vgae_forward.4} parent=11 // pred_check
        %p170 = pneg %p79
      $region18: #{vgae_forward.4} parent=11 // pred_check_branch
        %172 = sbr.rel (%p170) target = $region20
      $region19: #{vgae_forward.4} parent=11 // pred_region
        _
      $region20: #{vgae_forward.4} parent=11 // pred_fallthru
        _
      // Predicated region
      $region21: #{vgae_forward.4} parent=11 // pred_check
        %p173 = pneg %p100
      $region22: #{vgae_forward.4} parent=11 // pred_check_branch
        %175 = sbr.rel (%p173) target = $region24
      $region23: #{vgae_forward.4} parent=11 // pred_region
        _
      $region24: #{vgae_forward.4} parent=11 // pred_fallthru
        _
    $region12: #{vgae_forward.4} parent=5 // pred_fallthru
      _
    %p176 = scmp.lt.s32.totalorder %s11, 2
    // Predicated region
    $region25: #{vgae_forward.4} parent=5 // pred_check
      %p177 = pneg %p176
    $region26: #{vgae_forward.4} parent=5 // pred_check_branch
      %179 = sbr.rel (%p177) target = $region28
    $region27: #{vgae_forward.4} parent=5 // pred_region
      // Predicated region
      $region29: #{vgae_forward.4} parent=27 // pred_check
        %p180 = pneg %p31
      $region30: #{vgae_forward.4} parent=27 // pred_check_branch
        %182 = sbr.rel (%p180) target = $region32
      $region31: #{vgae_forward.4} parent=27 // pred_region
        %s183 = smul.u32 16, %s11
        %p184 = scmp.lt.s32.totalorder %s183, 31
        %s185 = scalar_select %p184, %s183, 31
        %s186 = smul.addr %s185, 2
        %s187 = smul.addr %s186, 4
        %s188 = scalar_lea.vmem %s0, %s187
        %s189 = smul.u32 16, %s11
      $region32: #{vgae_forward.4} parent=27 // pred_fallthru
        _
      // Predicated region
      $region33: #{vgae_forward.4} parent=27 // pred_check
        %p190 = pneg %p120
      $region34: #{vgae_forward.4} parent=27 // pred_check_branch
        %192 = sbr.rel (%p190) target = $region36
      $region35: #{vgae_forward.4} parent=27 // pred_region
        %s193 = smul.u32 16, %s11
        %p194 = scmp.lt.s32.totalorder %s193, 31
        %s195 = scalar_select %p194, %s193, 31
        %s196 = smul.addr %s195, 8
        %s197 = scalar_lea.vmem %s4, %s196
        %s198 = smul.u32 16, %s11
      $region36: #{vgae_forward.4} parent=27 // pred_fallthru
        _
    $region28: #{vgae_forward.4} parent=5 // pred_fallthru
      _
    %p199 = scmp.le.s32.totalorder 1, %s11
    %p200 = scmp.lt.s32.totalorder %s11, 3
    %p201 = pnand %p199, %p200
    %p202 = pneg %p201
    // Predicated region
    $region37: #{vgae_forward.4} parent=5 // pred_check
      _
    $region38: #{vgae_forward.4} parent=5 // pred_check_branch
      %204 = sbr.rel (%p201) target = $region40
    $region39: #{vgae_forward.4} parent=5 // pred_region
      %s205 = ssub.s32 %s11, 1
      %s206 = smul.u32 16, %s16
      %p207 = scmp.lt.s32.totalorder %s206, 31
      %s208 = scalar_select %p207, %s206, 31
      %s209 = smul.addr %s208, 2
      %s210 = smul.addr %s209, 4
      %s211 = scalar_lea.vmem %s0, %s210
      %p212 = pneg %p37
      %p213 = pneg %p34
      %p214 = pneg %p58
      %p215 = pneg %p55
      %p216 = pneg %p79
      %p217 = pneg %p76
      %p218 = pneg %p100
      %p219 = pneg %p97
      %s220 = smul.u32 16, %s16
      %p221 = scmp.lt.s32.totalorder %s220, 31
      %s222 = scalar_select %p221, %s220, 31
      %s223 = smul.addr %s222, 8
      %s224 = scalar_lea.vmem %s4, %s223
      %p225 = pneg %p126
      %p226 = pneg %p123
      %p227 = pneg %p152
      %p228 = pneg %p149
      %s229 = smul.u32 16, %s16
      %p230 = scmp.lt.s32.totalorder %s229, 31
      %s231 = scalar_select %p230, %s229, 31
      %s232 = smul.addr %s231, 4
      %s233 = scalar_lea.vmem %s5, %s232
      %s234 = smul.u32 16, %s16
      %p235 = scmp.lt.s32.totalorder %s234, 31
      %s236 = scalar_select %p235, %s234, 31
      %s237 = smul.addr %s236, 2
      %s238 = smul.addr %s237, 4
      %s239 = scalar_lea.vmem %s0, %s238
      %s240 = smul.u32 16, %s16
      %s241 = smul.u32 16, %s16
      %p242 = scmp.lt.s32.totalorder %s241, 31
      %s243 = scalar_select %p242, %s241, 31
      %s244 = smul.addr %s243, 8
      %s245 = scalar_lea.vmem %s4, %s244
      %s246 = smul.u32 16, %s16
      %s247 = smul.u32 16, %s16
      %p248 = scmp.lt.s32.totalorder %s247, 31
      %s249 = scalar_select %p248, %s247, 31
      %s250 = smul.addr %s249, 4
      %s251 = scalar_lea.vmem %s5, %s250
      %s252 = smul.u32 16, %s16
      %v254 = vld [vmem:[%s1] sm:$0xf]
      %v255 = vld [vmem:[%s1 + $0x4] sm:$0xf]
      %v256 = vld [vmem:[%s1 + $0x8] sm:$0xf]
      %v257 = vld [vmem:[%s1 + $0xc] sm:$0xf]
      %v258 = vld [vmem:[%s1 + $0x10] sm:$0xf]
      %v259 = vld [vmem:[%s1 + $0x14] sm:$0xf]
      %v260 = vld [vmem:[%s1 + $0x18] sm:$0xf]
      %v261 = vld [vmem:[%s1 + $0x1c] sm:$0xf]
      %v262 = vld [vmem:[%s1 + $0x20] sm:$0xf]
      %v263 = vld [vmem:[%s1 + $0x24] sm:$0xf]
      %v264 = vld [vmem:[%s1 + $0x28] sm:$0xf]
      %v265 = vld [vmem:[%s1 + $0x2c] sm:$0xf]
      %v266 = vld [vmem:[%s1 + $0x30] sm:$0xf]
      %v267 = vld [vmem:[%s1 + $0x34] sm:$0xf]
      %v268 = vld [vmem:[%s1 + $0x38] sm:$0xf]
      %v269 = vld [vmem:[%s1 + $0x3c] sm:$0xf]
      %v270 = vld [vmem:[%s1 + $0x40] sm:$0xf]
      %v271 = vld [vmem:[%s1 + $0x44] sm:$0xf]
      %v272 = vld [vmem:[%s1 + $0x48] sm:$0xf]
      %v273 = vld [vmem:[%s1 + $0x4c] sm:$0xf]
      %v274 = vld [vmem:[%s1 + $0x50] sm:$0xf]
      %v275 = vld [vmem:[%s1 + $0x54] sm:$0xf]
      %v276 = vld [vmem:[%s1 + $0x58] sm:$0xf]
      %v277 = vld [vmem:[%s1 + $0x5c] sm:$0xf]
      %v278 = vld [vmem:[%s1 + $0x60] sm:$0xf]
      %v279 = vld [vmem:[%s1 + $0x64] sm:$0xf]
      %v280 = vld [vmem:[%s1 + $0x68] sm:$0xf]
      %v281 = vld [vmem:[%s1 + $0x6c] sm:$0xf]
      %v282 = vld [vmem:[%s1 + $0x70] sm:$0xf]
      %v283 = vld [vmem:[%s1 + $0x74] sm:$0xf]
      %v284 = vld [vmem:[%s1 + $0x78] sm:$0xf]
      %v285 = vld [vmem:[%s1 + $0x7c] sm:$0xf]
      %v286 = vld [vmem:[%s2] sm:$0xff]
      %v287 = vld [vmem:[%s2 + $0x8] sm:$0xff]
      %v288 = vld [vmem:[%s2 + $0x10] sm:$0xff]
      %v289 = vld [vmem:[%s2 + $0x18] sm:$0xff]
      %v290 = vld [vmem:[%s2 + $0x20] sm:$0xff]
      %v291 = vld [vmem:[%s2 + $0x28] sm:$0xff]
      %v292 = vld [vmem:[%s2 + $0x30] sm:$0xff]
      %v293 = vld [vmem:[%s2 + $0x38] sm:$0xff]
      %v294 = vld [vmem:[%s2 + $0x40] sm:$0xff]
      %v295 = vld [vmem:[%s2 + $0x48] sm:$0xff]
      %v296 = vld [vmem:[%s2 + $0x50] sm:$0xff]
      %v297 = vld [vmem:[%s2 + $0x58] sm:$0xff]
      %v298 = vld [vmem:[%s2 + $0x60] sm:$0xff]
      %v299 = vld [vmem:[%s2 + $0x68] sm:$0xff]
      %v300 = vld [vmem:[%s2 + $0x70] sm:$0xff]
      %v301 = vld [vmem:[%s2 + $0x78] sm:$0xff]
      %v334 = vunpack.c.l.b16 %v254
      %v335 = vunpack.c.l.b16 %v255
      %v336 = vunpack.c.l.b16 %v256
      %v337 = vunpack.c.l.b16 %v257
      %v338 = vunpack.c.l.b16 %v258
      %v339 = vunpack.c.l.b16 %v259
      %v340 = vunpack.c.l.b16 %v260
      %v341 = vunpack.c.l.b16 %v261
      %v342 = vunpack.c.l.b16 %v262
      %v343 = vunpack.c.l.b16 %v263
      %v344 = vunpack.c.l.b16 %v264
      %v345 = vunpack.c.l.b16 %v265
      %v346 = vunpack.c.l.b16 %v266
      %v347 = vunpack.c.l.b16 %v267
      %v348 = vunpack.c.l.b16 %v268
      %v349 = vunpack.c.l.b16 %v269
      %v350 = vunpack.c.l.b16 %v270
      %v351 = vunpack.c.l.b16 %v271
      %v352 = vunpack.c.l.b16 %v272
      %v353 = vunpack.c.l.b16 %v273
      %v354 = vunpack.c.l.b16 %v274
      %v355 = vunpack.c.l.b16 %v275
      %v356 = vunpack.c.l.b16 %v276
      %v357 = vunpack.c.l.b16 %v277
      %v358 = vunpack.c.l.b16 %v278
      %v359 = vunpack.c.l.b16 %v279
      %v360 = vunpack.c.l.b16 %v280
      %v361 = vunpack.c.l.b16 %v281
      %v362 = vunpack.c.l.b16 %v282
      %v363 = vunpack.c.l.b16 %v283
      %v364 = vunpack.c.l.b16 %v284
      %v365 = vunpack.c.l.b16 %v285
      %v366 = vpack.c.b16 %v335, %v334
      %v367 = vpack.c.b16 %v337, %v336
      %v368 = vpack.c.b16 %v339, %v338
      %v369 = vpack.c.b16 %v341, %v340
      %v370 = vpack.c.b16 %v343, %v342
      %v371 = vpack.c.b16 %v345, %v344
      %v372 = vpack.c.b16 %v347, %v346
      %v373 = vpack.c.b16 %v349, %v348
      %v374 = vpack.c.b16 %v351, %v350
      %v375 = vpack.c.b16 %v353, %v352
      %v376 = vpack.c.b16 %v355, %v354
      %v377 = vpack.c.b16 %v357, %v356
      %v378 = vpack.c.b16 %v359, %v358
      %v379 = vpack.c.b16 %v361, %v360
      %v380 = vpack.c.b16 %v363, %v362
      %v381 = vpack.c.b16 %v365, %v364
      %v414 = vunpack.c.l.b16 %v286
      %v415 = vunpack.c.h.b16 %v286
      %v416 = vunpack.c.l.b16 %v287
      %v417 = vunpack.c.h.b16 %v287
      %v418 = vunpack.c.l.b16 %v288
      %v419 = vunpack.c.h.b16 %v288
      %v420 = vunpack.c.l.b16 %v289
      %v421 = vunpack.c.h.b16 %v289
      %v422 = vunpack.c.l.b16 %v290
      %v423 = vunpack.c.h.b16 %v290
      %v424 = vunpack.c.l.b16 %v291
      %v425 = vunpack.c.h.b16 %v291
      %v426 = vunpack.c.l.b16 %v292
      %v427 = vunpack.c.h.b16 %v292
      %v428 = vunpack.c.l.b16 %v293
      %v429 = vunpack.c.h.b16 %v293
      %v430 = vunpack.c.l.b16 %v294
      %v431 = vunpack.c.h.b16 %v294
      %v432 = vunpack.c.l.b16 %v295
      %v433 = vunpack.c.h.b16 %v295
      %v434 = vunpack.c.l.b16 %v296
      %v435 = vunpack.c.h.b16 %v296
      %v436 = vunpack.c.l.b16 %v297
      %v437 = vunpack.c.h.b16 %v297
      %v438 = vunpack.c.l.b16 %v298
      %v439 = vunpack.c.h.b16 %v298
      %v440 = vunpack.c.l.b16 %v299
      %v441 = vunpack.c.h.b16 %v299
      %v442 = vunpack.c.l.b16 %v300
      %v443 = vunpack.c.h.b16 %v300
      %v444 = vunpack.c.l.b16 %v301
      %v445 = vunpack.c.h.b16 %v301
      %v446 = vpack.c.b16 %v416, %v414
      %v447 = vpack.c.b16 %v417, %v415
      %v448 = vpack.c.b16 %v420, %v418
      %v449 = vpack.c.b16 %v421, %v419
      %v450 = vpack.c.b16 %v424, %v422
      %v451 = vpack.c.b16 %v425, %v423
      %v452 = vpack.c.b16 %v428, %v426
      %v453 = vpack.c.b16 %v429, %v427
      %v454 = vpack.c.b16 %v432, %v430
      %v455 = vpack.c.b16 %v433, %v431
      %v456 = vpack.c.b16 %v436, %v434
      %v457 = vpack.c.b16 %v437, %v435
      %v458 = vpack.c.b16 %v440, %v438
      %v459 = vpack.c.b16 %v441, %v439
      %v460 = vpack.c.b16 %v444, %v442
      %v461 = vpack.c.b16 %v445, %v443
      %478 = vmatprep.subr.bf16.mxu0 %v447
      %479 = vmatpush1.bf16.msra.mxu0 %v446
      %480 = vmatprep.subr.bf16.mxu0 %v449
      %481 = vmatpush1.bf16.msra.mxu0 %v448
      %482 = vmatprep.subr.bf16.mxu0 %v451
      %483 = vmatpush1.bf16.msra.mxu0 %v450
      %484 = vmatprep.subr.bf16.mxu0 %v453
      %485 = vmatpush1.bf16.msra.mxu0 %v452
      %486 = vmatprep.subr.bf16.mxu0 %v455
      %487 = vmatpush1.bf16.msra.mxu0 %v454
      %488 = vmatprep.subr.bf16.mxu0 %v457
      %489 = vmatpush1.bf16.msra.mxu0 %v456
      %490 = vmatprep.subr.bf16.mxu0 %v459
      %491 = vmatpush1.bf16.msra.mxu0 %v458
      %492 = vmatprep.subr.bf16.mxu0 %v461
      %493 = vmatpush1.bf16.msra.mxu0 %v460
      %494 = vmatprep.subr.bf16.mxu0 0
      %495 = vmatpush1.bf16.msra.mxu0 0
      %496 = vmatprep.subr.bf16.mxu0 0
      %497 = vmatpush1.bf16.msra.mxu0 0
      %498 = vmatprep.subr.bf16.mxu0 0
      %499 = vmatpush1.bf16.msra.mxu0 0
      %500 = vmatprep.subr.bf16.mxu0 0
      %501 = vmatpush1.bf16.msra.mxu0 0
      %502 = vmatprep.subr.bf16.mxu0 0
      %503 = vmatpush1.bf16.msra.mxu0 0
      %504 = vmatprep.subr.bf16.mxu0 0
      %505 = vmatpush1.bf16.msra.mxu0 0
      %506 = vmatprep.subr.bf16.mxu0 0
      %507 = vmatpush1.bf16.msra.mxu0 0
      %508 = vmatprep.subr.bf16.mxu0 0
      %509 = vmatpush1.bf16.msra.mxu0 0
      %510 = vmatprep.mubr.bf16.mxu0 0
      %511 = vmatmul.mubr.bf16.gmra.mrb[0].mxu0 %v366
      %v512 = vpop.f32.mrb[0].mxu0
      %v513 = vadd.f32 0.0, %v512
      %v514 = vpop.f32.mrb[0].mxu0
      %v515 = vadd.f32 0.0, %v514
      %v516 = vpop.f32.mrb[0].mxu0
      %v517 = vadd.f32 0.0, %v516
      %v518 = vpop.f32.mrb[0].mxu0
      %v519 = vadd.f32 0.0, %v518
      %520 = vmatprep.mubr.bf16.mxu0 0
      %521 = vmatmul.mubr.bf16.gmra.mrb[0].mxu0 %v367
      %v522 = vpop.f32.mrb[0].mxu0
      %v523 = vadd.f32 0.0, %v522
      %v524 = vpop.f32.mrb[0].mxu0
      %v525 = vadd.f32 0.0, %v524
      %v526 = vpop.f32.mrb[0].mxu0
      %v527 = vadd.f32 0.0, %v526
      %v528 = vpop.f32.mrb[0].mxu0
      %v529 = vadd.f32 0.0, %v528
      %530 = vmatprep.mubr.bf16.mxu0 0
      %531 = vmatmul.mubr.bf16.gmra.mrb[0].mxu0 %v368
      %v532 = vpop.f32.mrb[0].mxu0
      %v533 = vadd.f32 0.0, %v532
      %v534 = vpop.f32.mrb[0].mxu0
      %v535 = vadd.f32 0.0, %v534
      %v536 = vpop.f32.mrb[0].mxu0
      %v537 = vadd.f32 0.0, %v536
      %v538 = vpop.f32.mrb[0].mxu0
      %v539 = vadd.f32 0.0, %v538
      %540 = vmatprep.mubr.bf16.mxu0 0
      %541 = vmatmul.mubr.bf16.gmra.mrb[0].mxu0 %v369
      %v542 = vpop.f32.mrb[0].mxu0
      %v543 = vadd.f32 0.0, %v542
      %v544 = vpop.f32.mrb[0].mxu0
      %v545 = vadd.f32 0.0, %v544
      %v546 = vpop.f32.mrb[0].mxu0
      %v547 = vadd.f32 0.0, %v546
      %v548 = vpop.f32.mrb[0].mxu0
      %v549 = vadd.f32 0.0, %v548
      %550 = vmatprep.mubr.bf16.mxu0 0
      %551 = vmatmul.mubr.bf16.gmra.mrb[0].mxu0 %v370
      %v552 = vpop.f32.mrb[0].mxu0
      %v553 = vadd.f32 0.0, %v552
      %v554 = vpop.f32.mrb[0].mxu0
      %v555 = vadd.f32 0.0, %v554
      %v556 = vpop.f32.mrb[0].mxu0
      %v557 = vadd.f32 0.0, %v556
      %v558 = vpop.f32.mrb[0].mxu0
      %v559 = vadd.f32 0.0, %v558
      %560 = vmatprep.mubr.bf16.mxu0 0
      %561 = vmatmul.mubr.bf16.gmra.mrb[0].mxu0 %v371
      %v562 = vpop.f32.mrb[0].mxu0
      %v563 = vadd.f32 0.0, %v562
      %v564 = vpop.f32.mrb[0].mxu0
      %v565 = vadd.f32 0.0, %v564
      %v566 = vpop.f32.mrb[0].mxu0
      %v567 = vadd.f32 0.0, %v566
      %v568 = vpop.f32.mrb[0].mxu0
      %v569 = vadd.f32 0.0, %v568
      %570 = vmatprep.mubr.bf16.mxu0 0
      %571 = vmatmul.mubr.bf16.gmra.mrb[0].mxu0 %v372
      %v572 = vpop.f32.mrb[0].mxu0
      %v573 = vadd.f32 0.0, %v572
      %v574 = vpop.f32.mrb[0].mxu0
      %v575 = vadd.f32 0.0, %v574
      %v576 = vpop.f32.mrb[0].mxu0
      %v577 = vadd.f32 0.0, %v576
      %v578 = vpop.f32.mrb[0].mxu0
      %v579 = vadd.f32 0.0, %v578
      %580 = vmatprep.mubr.bf16.mxu0 0
      %581 = vmatmul.mubr.bf16.gmra.mrb[0].mxu0 %v373
      %v582 = vpop.f32.mrb[0].mxu0
      %v583 = vadd.f32 0.0, %v582
      %v584 = vpop.f32.mrb[0].mxu0
      %v585 = vadd.f32 0.0, %v584
      %v586 = vpop.f32.mrb[0].mxu0
      %v587 = vadd.f32 0.0, %v586
      %v588 = vpop.f32.mrb[0].mxu0
      %v589 = vadd.f32 0.0, %v588
      %590 = vmatprep.mubr.bf16.mxu0 0
      %591 = vmatmul.mubr.bf16.gmra.mrb[0].mxu0 %v374
      %v592 = vpop.f32.mrb[0].mxu0
      %v593 = vadd.f32 0.0, %v592
      %v594 = vpop.f32.mrb[0].mxu0
      %v595 = vadd.f32 0.0, %v594
      %v596 = vpop.f32.mrb[0].mxu0
      %v597 = vadd.f32 0.0, %v596
      %v598 = vpop.f32.mrb[0].mxu0
      %v599 = vadd.f32 0.0, %v598
      %600 = vmatprep.mubr.bf16.mxu0 0
      %601 = vmatmul.mubr.bf16.gmra.mrb[0].mxu0 %v375
      %v602 = vpop.f32.mrb[0].mxu0
      %v603 = vadd.f32 0.0, %v602
      %v604 = vpop.f32.mrb[0].mxu0
      %v605 = vadd.f32 0.0, %v604
      %v606 = vpop.f32.mrb[0].mxu0
      %v607 = vadd.f32 0.0, %v606
      %v608 = vpop.f32.mrb[0].mxu0
      %v609 = vadd.f32 0.0, %v608
      %610 = vmatprep.mubr.bf16.mxu0 0
      %611 = vmatmul.mubr.bf16.gmra.mrb[0].mxu0 %v376
      %v612 = vpop.f32.mrb[0].mxu0
      %v613 = vadd.f32 0.0, %v612
      %v614 = vpop.f32.mrb[0].mxu0
      %v615 = vadd.f32 0.0, %v614
      %v616 = vpop.f32.mrb[0].mxu0
      %v617 = vadd.f32 0.0, %v616
      %v618 = vpop.f32.mrb[0].mxu0
      %v619 = vadd.f32 0.0, %v618
      %620 = vmatprep.mubr.bf16.mxu0 0
      %621 = vmatmul.mubr.bf16.gmra.mrb[0].mxu0 %v377
      %v622 = vpop.f32.mrb[0].mxu0
      %v623 = vadd.f32 0.0, %v622
      %v624 = vpop.f32.mrb[0].mxu0
      %v625 = vadd.f32 0.0, %v624
      %v626 = vpop.f32.mrb[0].mxu0
      %v627 = vadd.f32 0.0, %v626
      %v628 = vpop.f32.mrb[0].mxu0
      %v629 = vadd.f32 0.0, %v628
      %630 = vmatprep.mubr.bf16.mxu0 0
      %631 = vmatmul.mubr.bf16.gmra.mrb[0].mxu0 %v378
      %v632 = vpop.f32.mrb[0].mxu0
      %v633 = vadd.f32 0.0, %v632
      %v634 = vpop.f32.mrb[0].mxu0
      %v635 = vadd.f32 0.0, %v634
      %v636 = vpop.f32.mrb[0].mxu0
      %v637 = vadd.f32 0.0, %v636
      %v638 = vpop.f32.mrb[0].mxu0
      %v639 = vadd.f32 0.0, %v638
      %640 = vmatprep.mubr.bf16.mxu0 0
      %641 = vmatmul.mubr.bf16.gmra.mrb[0].mxu0 %v379
      %v642 = vpop.f32.mrb[0].mxu0
      %v643 = vadd.f32 0.0, %v642
      %v644 = vpop.f32.mrb[0].mxu0
      %v645 = vadd.f32 0.0, %v644
      %v646 = vpop.f32.mrb[0].mxu0
      %v647 = vadd.f32 0.0, %v646
      %v648 = vpop.f32.mrb[0].mxu0
      %v649 = vadd.f32 0.0, %v648
      %650 = vmatprep.mubr.bf16.mxu0 0
      %651 = vmatmul.mubr.bf16.gmra.mrb[0].mxu0 %v380
      %v652 = vpop.f32.mrb[0].mxu0
      %v653 = vadd.f32 0.0, %v652
      %v654 = vpop.f32.mrb[0].mxu0
      %v655 = vadd.f32 0.0, %v654
      %v656 = vpop.f32.mrb[0].mxu0
      %v657 = vadd.f32 0.0, %v656
      %v658 = vpop.f32.mrb[0].mxu0
      %v659 = vadd.f32 0.0, %v658
      %660 = vmatprep.mubr.bf16.mxu0 0
      %661 = vmatmul.mubr.bf16.gmra.mrb[0].mxu0 %v381
      %v662 = vpop.f32.mrb[0].mxu0
      %v663 = vadd.f32 0.0, %v662
      %v664 = vpop.f32.mrb[0].mxu0
      %v665 = vadd.f32 0.0, %v664
      %v666 = vpop.f32.mrb[0].mxu0
      %v667 = vadd.f32 0.0, %v666
      %v668 = vpop.f32.mrb[0].mxu0
      %v669 = vadd.f32 0.0, %v668
      %670 = vdwg.mxu0
      %v671 = vld [vmem:[%s239] sm:$0xff]
      %v672 = vld [vmem:[%s239 + $0x8] sm:$0xff]
      %v673 = vld [vmem:[%s239 + $0x10] sm:$0xff]
      %v674 = vld [vmem:[%s239 + $0x18] sm:$0xff]
      %v675 = vld [vmem:[%s239 + $0x20] sm:$0xff]
      %v676 = vld [vmem:[%s239 + $0x28] sm:$0xff]
      %v677 = vld [vmem:[%s239 + $0x30] sm:$0xff]
      %v678 = vld [vmem:[%s239 + $0x38] sm:$0xff]
      %v679 = vld [vmem:[%s239 + $0x40] sm:$0xff]
      %v680 = vld [vmem:[%s239 + $0x48] sm:$0xff]
      %v681 = vld [vmem:[%s239 + $0x50] sm:$0xff]
      %v682 = vld [vmem:[%s239 + $0x58] sm:$0xff]
      %v683 = vld [vmem:[%s239 + $0x60] sm:$0xff]
      %v684 = vld [vmem:[%s239 + $0x68] sm:$0xff]
      %v685 = vld [vmem:[%s239 + $0x70] sm:$0xff]
      %v686 = vld [vmem:[%s239 + $0x78] sm:$0xff]
      %v687 = vpack.c.bf16 %v517, %v513
      %v688 = vpack.c.bf16 %v519, %v515
      %v689 = vpack.c.bf16 %v527, %v523
      %v690 = vpack.c.bf16 %v529, %v525
      %v691 = vpack.c.bf16 %v537, %v533
      %v692 = vpack.c.bf16 %v539, %v535
      %v693 = vpack.c.bf16 %v547, %v543
      %v694 = vpack.c.bf16 %v549, %v545
      %v695 = vpack.c.bf16 %v557, %v553
      %v696 = vpack.c.bf16 %v559, %v555
      %v697 = vpack.c.bf16 %v567, %v563
      %v698 = vpack.c.bf16 %v569, %v565
      %v699 = vpack.c.bf16 %v577, %v573
      %v700 = vpack.c.bf16 %v579, %v575
      %v701 = vpack.c.bf16 %v587, %v583
      %v702 = vpack.c.bf16 %v589, %v585
      %v703 = vpack.c.bf16 %v597, %v593
      %v704 = vpack.c.bf16 %v599, %v595
      %v705 = vpack.c.bf16 %v607, %v603
      %v706 = vpack.c.bf16 %v609, %v605
      %v707 = vpack.c.bf16 %v617, %v613
      %v708 = vpack.c.bf16 %v619, %v615
      %v709 = vpack.c.bf16 %v627, %v623
      %v710 = vpack.c.bf16 %v629, %v625
      %v711 = vpack.c.bf16 %v637, %v633
      %v712 = vpack.c.bf16 %v639, %v635
      %v713 = vpack.c.bf16 %v647, %v643
      %v714 = vpack.c.bf16 %v649, %v645
      %v715 = vpack.c.bf16 %v657, %v653
      %v716 = vpack.c.bf16 %v659, %v655
      %v717 = vpack.c.bf16 %v667, %v663
      %v718 = vpack.c.bf16 %v669, %v665
      %v719 = vld [vmem:[%s3] sm:$0x3]
      %v721 = vlaneseq
      %v722 = vshrl.u32 %v721, 7
      %v723 = vsub.s32 0, %v722
      %v724 = vrot.slane %v719, %v723
      %v725 = vlaneseq
      %v726 = vshrl.u32 %v725, 7
      %v727 = vsub.s32 1, %v726
      %v728 = vrot.slane %v719, %v727
      %v747 = vunpack.c.l.b16 %v671
      %v748 = vunpack.c.h.b16 %v671
      %v749 = vunpack.c.l.b16 %v672
      %v750 = vunpack.c.h.b16 %v672
      %v751 = vunpack.c.l.b16 %v673
      %v752 = vunpack.c.h.b16 %v673
      %v753 = vunpack.c.l.b16 %v674
      %v754 = vunpack.c.h.b16 %v674
      %v755 = vunpack.c.l.b16 %v675
      %v756 = vunpack.c.h.b16 %v675
      %v757 = vunpack.c.l.b16 %v676
      %v758 = vunpack.c.h.b16 %v676
      %v759 = vunpack.c.l.b16 %v677
      %v760 = vunpack.c.h.b16 %v677
      %v761 = vunpack.c.l.b16 %v678
      %v762 = vunpack.c.h.b16 %v678
      %v763 = vunpack.c.l.b16 %v679
      %v764 = vunpack.c.h.b16 %v679
      %v765 = vunpack.c.l.b16 %v680
      %v766 = vunpack.c.h.b16 %v680
      %v767 = vunpack.c.l.b16 %v681
      %v768 = vunpack.c.h.b16 %v681
      %v769 = vunpack.c.l.b16 %v682
      %v770 = vunpack.c.h.b16 %v682
      %v771 = vunpack.c.l.b16 %v683
      %v772 = vunpack.c.h.b16 %v683
      %v773 = vunpack.c.l.b16 %v684
      %v774 = vunpack.c.h.b16 %v684
      %v775 = vunpack.c.l.b16 %v685
      %v776 = vunpack.c.h.b16 %v685
      %v777 = vunpack.c.l.b16 %v686
      %v778 = vunpack.c.h.b16 %v686
      %v779 = vpack.c.b16 %v749, %v747
      %v780 = vpack.c.b16 %v750, %v748
      %v781 = vpack.c.b16 %v753, %v751
      %v782 = vpack.c.b16 %v754, %v752
      %v783 = vpack.c.b16 %v757, %v755
      %v784 = vpack.c.b16 %v758, %v756
      %v785 = vpack.c.b16 %v761, %v759
      %v786 = vpack.c.b16 %v762, %v760
      %v787 = vpack.c.b16 %v765, %v763
      %v788 = vpack.c.b16 %v766, %v764
      %v789 = vpack.c.b16 %v769, %v767
      %v790 = vpack.c.b16 %v770, %v768
      %v791 = vpack.c.b16 %v773, %v771
      %v792 = vpack.c.b16 %v774, %v772
      %v793 = vpack.c.b16 %v777, %v775
      %v794 = vpack.c.b16 %v778, %v776
      %811 = vmatprep.subr.bf16.mxu0 %v688
      %812 = vmatpush1.bf16.msra.mxu0 %v687
      %813 = vmatprep.subr.bf16.mxu0 %v690
      %814 = vmatpush1.bf16.msra.mxu0 %v689
      %815 = vmatprep.subr.bf16.mxu0 %v692
      %816 = vmatpush1.bf16.msra.mxu0 %v691
      %817 = vmatprep.subr.bf16.mxu0 %v694
      %818 = vmatpush1.bf16.msra.mxu0 %v693
      %819 = vmatprep.subr.bf16.mxu0 %v696
      %820 = vmatpush1.bf16.msra.mxu0 %v695
      %821 = vmatprep.subr.bf16.mxu0 %v698
      %822 = vmatpush1.bf16.msra.mxu0 %v697
      %823 = vmatprep.subr.bf16.mxu0 %v700
      %824 = vmatpush1.bf16.msra.mxu0 %v699
      %825 = vmatprep.subr.bf16.mxu0 %v702
      %826 = vmatpush1.bf16.msra.mxu0 %v701
      %827 = vmatprep.subr.bf16.mxu0 %v704
      %828 = vmatpush1.bf16.msra.mxu0 %v703
      %829 = vmatprep.subr.bf16.mxu0 %v706
      %830 = vmatpush1.bf16.msra.mxu0 %v705
      %831 = vmatprep.subr.bf16.mxu0 %v708
      %832 = vmatpush1.bf16.msra.mxu0 %v707
      %833 = vmatprep.subr.bf16.mxu0 %v710
      %834 = vmatpush1.bf16.msra.mxu0 %v709
      %835 = vmatprep.subr.bf16.mxu0 %v712
      %836 = vmatpush1.bf16.msra.mxu0 %v711
      %837 = vmatprep.subr.bf16.mxu0 %v714
      %838 = vmatpush1.bf16.msra.mxu0 %v713
      %839 = vmatprep.subr.bf16.mxu0 %v716
      %840 = vmatpush1.bf16.msra.mxu0 %v715
      %841 = vmatprep.subr.bf16.mxu0 %v718
      %842 = vmatpush1.bf16.msra.mxu0 %v717
      %843 = vmatprep.mubr.bf16.mxu0 %v780
      %844 = vmatmul.mubr.bf16.gmra.mrb[0].mxu0 %v779
      %v845 = vpop.f32.mrb[0].mxu0
      %v846 = vadd.f32 %v724, %v845
      %v847 = vpop.f32.mrb[0].mxu0
      %v848 = vadd.f32 %v728, %v847
      %v849 = vpop.f32.mrb[0].mxu0
      %v850 = vadd.f32 %v724, %v849
      %v851 = vpop.f32.mrb[0].mxu0
      %v852 = vadd.f32 %v728, %v851
      %853 = vmatprep.mubr.bf16.mxu0 %v782
      %854 = vmatmul.mubr.bf16.gmra.mrb[0].mxu0 %v781
      %v855 = vpop.f32.mrb[0].mxu0
      %v856 = vadd.f32 %v724, %v855
      %v857 = vpop.f32.mrb[0].mxu0
      %v858 = vadd.f32 %v728, %v857
      %v859 = vpop.f32.mrb[0].mxu0
      %v860 = vadd.f32 %v724, %v859
      %v861 = vpop.f32.mrb[0].mxu0
      %v862 = vadd.f32 %v728, %v861
      %863 = vmatprep.mubr.bf16.mxu0 %v784
      %864 = vmatmul.mubr.bf16.gmra.mrb[0].mxu0 %v783
      %v865 = vpop.f32.mrb[0].mxu0
      %v866 = vadd.f32 %v724, %v865
      %v867 = vpop.f32.mrb[0].mxu0
      %v868 = vadd.f32 %v728, %v867
      %v869 = vpop.f32.mrb[0].mxu0
      %v870 = vadd.f32 %v724, %v869
      %v871 = vpop.f32.mrb[0].mxu0
      %v872 = vadd.f32 %v728, %v871
      %873 = vmatprep.mubr.bf16.mxu0 %v786
      %874 = vmatmul.mubr.bf16.gmra.mrb[0].mxu0 %v785
      %v875 = vpop.f32.mrb[0].mxu0
      %v876 = vadd.f32 %v724, %v875
      %v877 = vpop.f32.mrb[0].mxu0
      %v878 = vadd.f32 %v728, %v877
      %v879 = vpop.f32.mrb[0].mxu0
      %v880 = vadd.f32 %v724, %v879
      %v881 = vpop.f32.mrb[0].mxu0
      %v882 = vadd.f32 %v728, %v881
      %883 = vmatprep.mubr.bf16.mxu0 %v788
      %884 = vmatmul.mubr.bf16.gmra.mrb[0].mxu0 %v787
      %v885 = vpop.f32.mrb[0].mxu0
      %v886 = vadd.f32 %v724, %v885
      %v887 = vpop.f32.mrb[0].mxu0
      %v888 = vadd.f32 %v728, %v887
      %v889 = vpop.f32.mrb[0].mxu0
      %v890 = vadd.f32 %v724, %v889
      %v891 = vpop.f32.mrb[0].mxu0
      %v892 = vadd.f32 %v728, %v891
      %893 = vmatprep.mubr.bf16.mxu0 %v790
      %894 = vmatmul.mubr.bf16.gmra.mrb[0].mxu0 %v789
      %v895 = vpop.f32.mrb[0].mxu0
      %v896 = vadd.f32 %v724, %v895
      %v897 = vpop.f32.mrb[0].mxu0
      %v898 = vadd.f32 %v728, %v897
      %v899 = vpop.f32.mrb[0].mxu0
      %v900 = vadd.f32 %v724, %v899
      %v901 = vpop.f32.mrb[0].mxu0
      %v902 = vadd.f32 %v728, %v901
      %903 = vmatprep.mubr.bf16.mxu0 %v792
      %904 = vmatmul.mubr.bf16.gmra.mrb[0].mxu0 %v791
      %v905 = vpop.f32.mrb[0].mxu0
      %v906 = vadd.f32 %v724, %v905
      %v907 = vpop.f32.mrb[0].mxu0
      %v908 = vadd.f32 %v728, %v907
      %v909 = vpop.f32.mrb[0].mxu0
      %v910 = vadd.f32 %v724, %v909
      %v911 = vpop.f32.mrb[0].mxu0
      %v912 = vadd.f32 %v728, %v911
      %913 = vmatprep.mubr.bf16.mxu0 %v794
      %914 = vmatmul.mubr.bf16.gmra.mrb[0].mxu0 %v793
      %v915 = vpop.f32.mrb[0].mxu0
      %v916 = vadd.f32 %v724, %v915
      %v917 = vpop.f32.mrb[0].mxu0
      %v918 = vadd.f32 %v728, %v917
      %v919 = vpop.f32.mrb[0].mxu0
      %v920 = vadd.f32 %v724, %v919
      %v921 = vpop.f32.mrb[0].mxu0
      %v922 = vadd.f32 %v728, %v921
      %923 = vdwg.mxu0
      %v924 = vld [vmem:[%s245] sm:$0xff]
      %v925 = vld [vmem:[%s245 + $0x8] sm:$0xff]
      %v926 = vld [vmem:[%s245 + $0x10] sm:$0xff]
      %v927 = vld [vmem:[%s245 + $0x18] sm:$0xff]
      %v928 = vld [vmem:[%s245 + $0x20] sm:$0xff]
      %v929 = vld [vmem:[%s245 + $0x28] sm:$0xff]
      %v930 = vld [vmem:[%s245 + $0x30] sm:$0xff]
      %v931 = vld [vmem:[%s245 + $0x38] sm:$0xff]
      %v932 = vld [vmem:[%s245 + $0x40] sm:$0xff]
      %v933 = vld [vmem:[%s245 + $0x48] sm:$0xff]
      %v934 = vld [vmem:[%s245 + $0x50] sm:$0xff]
      %v935 = vld [vmem:[%s245 + $0x58] sm:$0xff]
      %v936 = vld [vmem:[%s245 + $0x60] sm:$0xff]
      %v937 = vld [vmem:[%s245 + $0x68] sm:$0xff]
      %v938 = vld [vmem:[%s245 + $0x70] sm:$0xff]
      %v939 = vld [vmem:[%s245 + $0x78] sm:$0xff]
      %v940 = vmul.f32 %v848, 1.442695
      %v941 = vpow.pop %v940
      %v942 = vmul.f32 %v852, 1.442695
      %v943 = vpow.pop %v942
      %v944 = vmul.f32 %v858, 1.442695
      %v945 = vpow.pop %v944
      %v946 = vmul.f32 %v862, 1.442695
      %v947 = vpow.pop %v946
      %v948 = vmul.f32 %v868, 1.442695
      %v949 = vpow.pop %v948
      %v950 = vmul.f32 %v872, 1.442695
      %v951 = vpow.pop %v950
      %v952 = vmul.f32 %v878, 1.442695
      %v953 = vpow.pop %v952
      %v954 = vmul.f32 %v882, 1.442695
      %v955 = vpow.pop %v954
      %v956 = vmul.f32 %v888, 1.442695
      %v957 = vpow.pop %v956
      %v958 = vmul.f32 %v892, 1.442695
      %v959 = vpow.pop %v958
      %v960 = vmul.f32 %v898, 1.442695
      %v961 = vpow.pop %v960
      %v962 = vmul.f32 %v902, 1.442695
      %v963 = vpow.pop %v962
      %v964 = vmul.f32 %v908, 1.442695
      %v965 = vpow.pop %v964
      %v966 = vmul.f32 %v912, 1.442695
      %v967 = vpow.pop %v966
      %v968 = vmul.f32 %v918, 1.442695
      %v969 = vpow.pop %v968
      %v970 = vmul.f32 %v922, 1.442695
      %v971 = vpow.pop %v970
      %v972 = vmul.f32 %v924, %v941
      %v973 = vmul.f32 %v925, %v943
      %v974 = vmul.f32 %v926, %v945
      %v975 = vmul.f32 %v927, %v947
      %v976 = vmul.f32 %v928, %v949
      %v977 = vmul.f32 %v929, %v951
      %v978 = vmul.f32 %v930, %v953
      %v979 = vmul.f32 %v931, %v955
      %v980 = vmul.f32 %v932, %v957
      %v981 = vmul.f32 %v933, %v959
      %v982 = vmul.f32 %v934, %v961
      %v983 = vmul.f32 %v935, %v963
      %v984 = vmul.f32 %v936, %v965
      %v985 = vmul.f32 %v937, %v967
      %v986 = vmul.f32 %v938, %v969
      %v987 = vmul.f32 %v939, %v971
      %v988 = vadd.f32 %v846, %v972
      %v989 = vadd.f32 %v850, %v973
      %v990 = vadd.f32 %v856, %v974
      %v991 = vadd.f32 %v860, %v975
      %v992 = vadd.f32 %v866, %v976
      %v993 = vadd.f32 %v870, %v977
      %v994 = vadd.f32 %v876, %v978
      %v995 = vadd.f32 %v880, %v979
      %v996 = vadd.f32 %v886, %v980
      %v997 = vadd.f32 %v890, %v981
      %v998 = vadd.f32 %v896, %v982
      %v999 = vadd.f32 %v900, %v983
      %v1000 = vadd.f32 %v906, %v984
      %v1001 = vadd.f32 %v910, %v985
      %v1002 = vadd.f32 %v916, %v986
      %v1003 = vadd.f32 %v920, %v987
      %v1004 = vpack.c.bf16 %v989, %v988
      %v1005 = vpack.c.bf16 %v991, %v990
      %v1006 = vpack.c.bf16 %v993, %v992
      %v1007 = vpack.c.bf16 %v995, %v994
      %v1008 = vpack.c.bf16 %v997, %v996
      %v1009 = vpack.c.bf16 %v999, %v998
      %v1010 = vpack.c.bf16 %v1001, %v1000
      %v1011 = vpack.c.bf16 %v1003, %v1002
      %v1020 = vunpack.c.l.b16 %v1004
      %v1021 = vunpack.c.h.b16 %v1004
      %v1022 = vunpack.c.l.b16 %v1005
      %v1023 = vunpack.c.h.b16 %v1005
      %v1024 = vunpack.c.l.b16 %v1006
      %v1025 = vunpack.c.h.b16 %v1006
      %v1026 = vunpack.c.l.b16 %v1007
      %v1027 = vunpack.c.h.b16 %v1007
      %v1028 = vunpack.c.l.b16 %v1008
      %v1029 = vunpack.c.h.b16 %v1008
      %v1030 = vunpack.c.l.b16 %v1009
      %v1031 = vunpack.c.h.b16 %v1009
      %v1032 = vunpack.c.l.b16 %v1010
      %v1033 = vunpack.c.h.b16 %v1010
      %v1034 = vunpack.c.l.b16 %v1011
      %v1035 = vunpack.c.h.b16 %v1011
      %v1036 = vpack.c.b16 %v1020, %v1020
      %v1037 = vpack.c.b16 %v1021, %v1021
      %v1038 = vpack.c.b16 %v1022, %v1022
      %v1039 = vpack.c.b16 %v1023, %v1023
      %v1040 = vpack.c.b16 %v1024, %v1024
      %v1041 = vpack.c.b16 %v1025, %v1025
      %v1042 = vpack.c.b16 %v1026, %v1026
      %v1043 = vpack.c.b16 %v1027, %v1027
      %v1044 = vpack.c.b16 %v1028, %v1028
      %v1045 = vpack.c.b16 %v1029, %v1029
      %v1046 = vpack.c.b16 %v1030, %v1030
      %v1047 = vpack.c.b16 %v1031, %v1031
      %v1048 = vpack.c.b16 %v1032, %v1032
      %v1049 = vpack.c.b16 %v1033, %v1033
      %v1050 = vpack.c.b16 %v1034, %v1034
      %v1051 = vpack.c.b16 %v1035, %v1035
      %1068 = vst [vmem:[%s251] sm:$0xf] %v1036
      %1069 = vst [vmem:[%s251 + $0x4] sm:$0xf] %v1037
      %1070 = vst [vmem:[%s251 + $0x8] sm:$0xf] %v1038
      %1071 = vst [vmem:[%s251 + $0xc] sm:$0xf] %v1039
      %1072 = vst [vmem:[%s251 + $0x10] sm:$0xf] %v1040
      %1073 = vst [vmem:[%s251 + $0x14] sm:$0xf] %v1041
      %1074 = vst [vmem:[%s251 + $0x18] sm:$0xf] %v1042
      %1075 = vst [vmem:[%s251 + $0x1c] sm:$0xf] %v1043
      %1076 = vst [vmem:[%s251 + $0x20] sm:$0xf] %v1044
      %1077 = vst [vmem:[%s251 + $0x24] sm:$0xf] %v1045
      %1078 = vst [vmem:[%s251 + $0x28] sm:$0xf] %v1046
      %1079 = vst [vmem:[%s251 + $0x2c] sm:$0xf] %v1047
      %1080 = vst [vmem:[%s251 + $0x30] sm:$0xf] %v1048
      %1081 = vst [vmem:[%s251 + $0x34] sm:$0xf] %v1049
      %1082 = vst [vmem:[%s251 + $0x38] sm:$0xf] %v1050
      %1083 = vst [vmem:[%s251 + $0x3c] sm:$0xf] %v1051
      %s1084 = smul.u32 16, %s16
      %p1085 = scmp.lt.s32.totalorder %s1084, 31
      %s1086 = scalar_select %p1085, %s1084, 31
      %s1087 = smul.addr %s1086, 4
      %s1088 = scalar_lea.vmem %s5, %s1087
      // Predicated region
      $region41: #{vgae_forward.4} parent=39 // pred_check
        %p1089 = pneg %p149
      $region42: #{vgae_forward.4} parent=39 // pred_check_branch
        %1091 = sbr.rel (%p1089) target = $region44
      $region43: #{vgae_forward.4} parent=39 // pred_region
        %s1092 = smul.u32 16, %s16
      $region44: #{vgae_forward.4} parent=39 // pred_fallthru
        _
    $region40: #{vgae_forward.4} parent=5 // pred_fallthru
      _
    %p1093 = scmp.le.s32.totalorder 2, %s11
    // Predicated region
    $region45: #{vgae_forward.4} parent=5 // pred_check
      %p1094 = pneg %p1093
    $region46: #{vgae_forward.4} parent=5 // pred_check_branch
      %1096 = sbr.rel (%p1094) target = $region48
    $region47: #{vgae_forward.4} parent=5 // pred_region
      %s1097 = ssub.s32 %s11, 2
      // Predicated region
      $region49: #{vgae_forward.4} parent=47 // pred_check
        %p1098 = pneg %p155
      $region50: #{vgae_forward.4} parent=47 // pred_check_branch
        %1100 = sbr.rel (%p1098) target = $region52
      $region51: #{vgae_forward.4} parent=47 // pred_region
        %s1101 = smul.u32 16, %s17
        %p1102 = scmp.lt.s32.totalorder %s1101, 31
        %s1103 = scalar_select %p1102, %s1101, 31
        %s1104 = smul.addr %s1103, 4
        %s1105 = scalar_lea.vmem %s5, %s1104
      $region52: #{vgae_forward.4} parent=47 // pred_fallthru
        _
    $region48: #{vgae_forward.4} parent=5 // pred_fallthru
      _
  $region6: #{vgae_forward.4} parent=0 // loop_footer
    %s15 = sadd.s32 1, %s11
  $region7: #{vgae_forward.4} parent=0 // loop_footer_branch
    %10 = sbr.rel target = $region3
  $region8: #{vgae_forward.4} parent=0 // loop_exit
    _

</llo_original>
